<compile_context>
chip_gen: v5e
topology: v5e:2x2
jax: 0.10.0
libtpu: 0.0.40
codegen_flags: <defaults>
</compile_context>

<pallas_src>
import functools

import jax
import jax.numpy as jnp
from jax import lax
from jax.experimental import pallas as pl
from jax.experimental.pallas import tpu as pltpu


# ----------------------------------------------------------------------------
# kernel: one grid step == block_b videos
# ----------------------------------------------------------------------------
def _graph_sc_kernel(s_ref, w_ref, b_ref, o_ref, *, n_frames):
    # s_ref : (Bb, T, C)  f32   per-video frame states (spatial mean already applied)
    # w_ref : (C, 2C)     bf16  [W1^T | W2^T]
    # b_ref : (1, 2C)     f32   [b1 | b2]
    # o_ref : (Bb, 1, C)  f32
    Bb, T, C = s_ref.shape
    state = s_ref[...]                                    # (Bb, T, C), f32
    state_bf = state.astype(jnp.bfloat16)

    # Conv1 | Conv2 fused into one MXU matmul over all Bb*T frames at once
    # (bf16 operands, f32 accumulation).
    mats = jnp.dot(state_bf.reshape(Bb * T, C), w_ref[...],
                   preferred_element_type=jnp.float32) + b_ref[...]
    mats = mats.reshape(Bb, T, 2 * C)
    mat1 = mats[:, :, :C]                                 # (Bb, T, C)
    mat2 = mats[:, :, C:]                                 # (Bb, T, C)

    # Per-video adjacency: contract over channels with both operands C-minor
    # (trans_b layout -> no explicit transpose of a skinny operand).
    adj = jnp.einsum('btc,bsc->bts', mat1, mat2,
                     preferred_element_type=jnp.float32)  # (Bb, T, T)

    # Per-video global standardisation (torch.std -> unbiased, N-1).
    n = n_frames * n_frames
    mu = jnp.sum(adj, axis=(1, 2), keepdims=True) * (1.0 / n)
    var = jnp.sum((adj - mu) ** 2, axis=(1, 2), keepdims=True) * (1.0 / (n - 1))
    adj_norm = (adj - mu) * lax.rsqrt(var)

    # Softmax over dim=1 of each (T, T) adjacency (last axis here).  adj_norm is
    # standardised so exp cannot overflow -> skip the usual row-max subtraction.
    e = jnp.exp(adj_norm)
    soft = e * pl.reciprocal(jnp.sum(e, axis=2, keepdims=True), approx=True)

    # One propagation step (bf16 MXU matmul, f32 residual), then frame mean.
    upd = jnp.einsum('bts,bsc->btc', soft.astype(jnp.bfloat16), state_bf,
                     preferred_element_type=jnp.float32)  # (Bb, T, C)
    new_state = upd + state
    # TODO(synk): nn.Dropout reproduced in eval mode (identity); training-mode
    #             stochastic masking is not reproduced.
    o_ref[...] = jnp.mean(new_state, axis=1, keepdims=True)   # (Bb, 1, C)


# ----------------------------------------------------------------------------
# wrapper
# ----------------------------------------------------------------------------
def prepare_graph_sc_weights(w1, b1, w2, b2):
    """One-time weight prep: fold the two 1x1 convs into a single MXU operand."""
    C = w1.shape[0]
    w_cat = jnp.concatenate([w1.T, w2.T], axis=1).astype(jnp.bfloat16)   # (C, 2C)
    b_cat = jnp.concatenate([b1, b2], axis=0).reshape(1, 2 * C).astype(jnp.float32)
    return w_cat, b_cat


def _pick_block_b(B, max_block=32):
    """Largest divisor of B that is <= max_block and still leaves >= 2 grid steps."""
    if B <= 1:
        return 1
    best = 1
    for blk in range(1, min(B // 2, max_block) + 1):
        if B % blk == 0:
            best = blk
    return best


def conv_graph_sc_forward(x, w_cat, b_cat):
    """x: (B, T, C, H, W) NCHW frames; w_cat: (C, 2C) bf16; b_cat: (1, 2C) f32."""
    B, T, C, H, W = x.shape
    assert C % 128 == 0, "channel dim must be lane-aligned (module fixes C=512)"
    assert w_cat.shape == (C, 2 * C) and b_cat.shape == (1, 2 * C)

    # Spatial mean in XLA: x is read from HBM exactly once (no layout transpose
    # round-trip); only the tiny (B, T, C) states are streamed to the kernel.
    state_all = jnp.mean(x, axis=(3, 4))                      # (B, T, C), f32

    block_b = _pick_block_b(B)
    grid = (B // block_b,)

    out = pl.pallas_call(
        functools.partial(_graph_sc_kernel, n_frames=T),
        out_shape=jax.ShapeDtypeStruct((B, 1, C), jnp.float32),
        grid_spec=pltpu.PrefetchScalarGridSpec(
            num_scalar_prefetch=0,
            grid=grid,
            in_specs=[
                pl.BlockSpec((block_b, T, C), lambda i: (i, 0, 0)),
                pl.BlockSpec((C, 2 * C), lambda i: (0, 0)),
                pl.BlockSpec((1, 2 * C), lambda i: (0, 0)),
            ],
            out_specs=pl.BlockSpec((block_b, 1, C), lambda i: (i, 0, 0)),
        ),
        compiler_params=pltpu.CompilerParams(
            dimension_semantics=("parallel",),
        ),
    )(state_all, w_cat, b_cat)
    return out.reshape(B, C)


# ----------------------------------------------------------------------------
# pure-JAX reference (mirrors the PyTorch forward in f32)
# ----------------------------------------------------------------------------
def conv_graph_sc_reference(x, w1, b1, w2, b2):
    state_all = jnp.mean(x, axis=(3, 4))                    # (B, T, C)
    outs = []
    for b in range(x.shape[0]):
        s = state_all[b]                                    # (T, C)
        mat1 = s @ w1.T + b1
        mat2 = s @ w2.T + b2
        adj = mat1 @ mat2.T
        adj_norm = (adj - jnp.mean(adj)) / jnp.std(adj, ddof=1)
        e = jnp.exp(adj_norm - jnp.max(adj_norm, axis=1, keepdims=True))
        soft = e / jnp.sum(e, axis=1, keepdims=True)
        new_state = soft @ s + s
        outs.append(jnp.mean(new_state, axis=0))
    return jnp.stack(outs, axis=0)


if __name__ == "__main__":
    B, T, C, H, W = 2, 4, 512, 8, 8          # C=512 is fixed by the module

    key = jax.random.PRNGKey(0)
    kx, kw1, kb1, kw2, kb2 = jax.random.split(key, 5)
    x = jax.random.normal(kx, (B, T, C, H, W), jnp.float32)
    # module init: weight/bias ~ N(0, 0.01)
    w1 = 0.01 * jax.random.normal(kw1, (C, C), jnp.float32)
    b1 = 0.01 * jax.random.normal(kb1, (C,), jnp.float32)
    w2 = 0.01 * jax.random.normal(kw2, (C, C), jnp.float32)
    b2 = 0.01 * jax.random.normal(kb2, (C,), jnp.float32)

    # weight prep hoisted out of the per-call path (run once, reuse per call)
    w_cat, b_cat = prepare_graph_sc_weights(w1, b1, w2, b2)
    w_cat, b_cat = jax.block_until_ready((w_cat, b_cat))

    fwd = jax.jit(conv_graph_sc_forward)
    out = jax.block_until_ready(fwd(x, w_cat, b_cat))

    assert out.shape == (B, C) and out.dtype == jnp.float32
    assert bool(jnp.isfinite(out).all())

    ref = conv_graph_sc_reference(x, w1, b1, w2, b2)
    max_err = float(jnp.max(jnp.abs(out - ref)))
    assert max_err < 1e-2, f"max abs err vs reference: {max_err}"
    print("KERNEL_OK")
</pallas_src>

<mosaic_0001>
module attributes {stable_mosaic.version = 11 : i64} {
  func.func @_graph_sc_kernel(%arg0: i32, %arg1: memref<1x4x512xf32, #tpu.memory_space<vmem>>, %arg2: memref<512x1024xbf16, #tpu.memory_space<vmem>>, %arg3: memref<1x1024xf32, #tpu.memory_space<vmem>>, %arg4: memref<1x1x512xf32, #tpu.memory_space<vmem>>) attributes {dimension_semantics = [#tpu.dimension_semantics<parallel>], iteration_bounds = array<i64: 2>, scalar_prefetch = 0 : i64, scratch_operands = 0 : i64, tpu.core_type = #tpu.core_type<tc>, window_params = [{transform_indices = @transform_0, window_bounds = array<i64: 1, 4, 512>}, {pipeline_mode = #tpu.pipeline_mode<synchronous>, transform_indices = @transform_1, window_bounds = array<i64: 512, 1024>}, {pipeline_mode = #tpu.pipeline_mode<synchronous>, transform_indices = @transform_2, window_bounds = array<i64: 1, 1024>}, {transform_indices = @transform_3, window_bounds = array<i64: 1, 1, 512>}]} {
    %c0 = arith.constant 0 : index
    %c0_0 = arith.constant 0 : index
    %c0_1 = arith.constant 0 : index
    %0 = vector.load %arg1[%c0, %c0_0, %c0_1] : memref<1x4x512xf32, #tpu.memory_space<vmem>>, vector<1x4x512xf32>
    %1 = arith.truncf %0 : vector<1x4x512xf32> to vector<1x4x512xbf16>
    %2 = vector.shape_cast %1 : vector<1x4x512xbf16> to vector<4x512xbf16>
    %c0_2 = arith.constant 0 : index
    %c0_3 = arith.constant 0 : index
    %3 = vector.load %arg2[%c0_2, %c0_3] : memref<512x1024xbf16, #tpu.memory_space<vmem>>, vector<512x1024xbf16>
    %cst = arith.constant dense<0.000000e+00> : vector<4x1024xf32>
    %4 = tpu.matmul %2, %3, %cst {dimension_numbers = #tpu.dot_dimension_numbers<[1], [0], [0], [1], [0, 0, 1, 1], [], []>} : vector<4x512xbf16>, vector<512x1024xbf16>, vector<4x1024xf32> -> vector<4x1024xf32>
    %c0_4 = arith.constant 0 : index
    %c0_5 = arith.constant 0 : index
    %5 = vector.load %arg3[%c0_4, %c0_5] : memref<1x1024xf32, #tpu.memory_space<vmem>>, vector<1x1024xf32>
    %6 = vector.broadcast %5 : vector<1x1024xf32> to vector<4x1024xf32>
    %7 = arith.addf %4, %6 : vector<4x1024xf32>
    %8 = vector.shape_cast %7 : vector<4x1024xf32> to vector<1x4x1024xf32>
    %9 = vector.extract_strided_slice %8 {offsets = [0, 0, 0], sizes = [1, 4, 512], strides = [1, 1, 1]} : vector<1x4x1024xf32> to vector<1x4x512xf32>
    %10 = vector.extract_strided_slice %8 {offsets = [0, 0, 512], sizes = [1, 4, 512], strides = [1, 1, 1]} : vector<1x4x1024xf32> to vector<1x4x512xf32>
    "tpu.trace_start"() <{level = 10 : i32, message = "btc,bsc->bts"}> : () -> ()
    %cst_6 = arith.constant dense<0.000000e+00> : vector<1x4x4xf32>
    %11 = tpu.matmul %9, %10, %cst_6 {dimension_numbers = #tpu.dot_dimension_numbers<[2], [2], [1], [1], [0, 0, 0, 1, 1, 1], [0], [0]>} : vector<1x4x512xf32>, vector<1x4x512xf32>, vector<1x4x4xf32> -> vector<1x4x4xf32>
    "tpu.trace_stop"() : () -> ()
    %cst_7 = arith.constant dense<0.000000e+00> : vector<1xf32>
    %12 = vector.multi_reduction <add>, %11, %cst_7 [1, 2] : vector<1x4x4xf32> to vector<1xf32>
    %13 = vector.shape_cast %12 : vector<1xf32> to vector<1x1x1xf32>
    %cst_8 = arith.constant 6.250000e-02 : f32
    %14 = vector.broadcast %cst_8 : f32 to vector<1x1x1xf32>
    %15 = arith.mulf %13, %14 : vector<1x1x1xf32>
    %16 = vector.broadcast %15 : vector<1x1x1xf32> to vector<1x4x4xf32>
    %17 = arith.subf %11, %16 : vector<1x4x4xf32>
    %18 = arith.mulf %17, %17 : vector<1x4x4xf32>
    %cst_9 = arith.constant dense<0.000000e+00> : vector<1xf32>
    %19 = vector.multi_reduction <add>, %18, %cst_9 [1, 2] : vector<1x4x4xf32> to vector<1xf32>
    %20 = vector.shape_cast %19 : vector<1xf32> to vector<1x1x1xf32>
    %cst_10 = arith.constant 0.0666666701 : f32
    %21 = vector.broadcast %cst_10 : f32 to vector<1x1x1xf32>
    %22 = arith.mulf %20, %21 : vector<1x1x1xf32>
    %23 = vector.broadcast %15 : vector<1x1x1xf32> to vector<1x4x4xf32>
    %24 = arith.subf %11, %23 : vector<1x4x4xf32>
    %25 = math.rsqrt %22 : vector<1x1x1xf32>
    %26 = vector.broadcast %25 : vector<1x1x1xf32> to vector<1x4x4xf32>
    %27 = arith.mulf %24, %26 : vector<1x4x4xf32>
    %28 = math.exp %27 : vector<1x4x4xf32>
    %cst_11 = arith.constant dense<0.000000e+00> : vector<1x4xf32>
    %29 = vector.multi_reduction <add>, %28, %cst_11 [2] : vector<1x4x4xf32> to vector<1x4xf32>
    %30 = vector.shape_cast %29 : vector<1x4xf32> to vector<1x4x1xf32>
    %31 = tpu.reciprocal %30 {approx = true} : vector<1x4x1xf32> -> vector<1x4x1xf32>
    %32 = vector.broadcast %31 : vector<1x4x1xf32> to vector<1x4x4xf32>
    %33 = arith.mulf %28, %32 : vector<1x4x4xf32>
    %34 = arith.truncf %33 : vector<1x4x4xf32> to vector<1x4x4xbf16>
    "tpu.trace_start"() <{level = 10 : i32, message = "bts,bsc->btc"}> : () -> ()
    %cst_12 = arith.constant dense<0.000000e+00> : vector<1x4x512xf32>
    %35 = tpu.matmul %34, %1, %cst_12 {dimension_numbers = #tpu.dot_dimension_numbers<[2], [1], [1], [2], [0, 0, 0, 1, 1, 2], [0], [0]>} : vector<1x4x4xbf16>, vector<1x4x512xbf16>, vector<1x4x512xf32> -> vector<1x4x512xf32>
    "tpu.trace_stop"() : () -> ()
    %36 = arith.addf %35, %0 : vector<1x4x512xf32>
    %cst_13 = arith.constant dense<0.000000e+00> : vector<1x512xf32>
    %37 = vector.multi_reduction <add>, %36, %cst_13 [1] : vector<1x4x512xf32> to vector<1x512xf32>
    %38 = vector.shape_cast %37 : vector<1x512xf32> to vector<1x1x512xf32>
    %cst_14 = arith.constant 4.000000e+00 : f32
    %39 = vector.broadcast %cst_14 : f32 to vector<1x1x512xf32>
    %40 = arith.divf %38, %39 : vector<1x1x512xf32>
    %c0_15 = arith.constant 0 : index
    %c0_16 = arith.constant 0 : index
    %c0_17 = arith.constant 0 : index
    %41 = vector.load %arg4[%c0_15, %c0_16, %c0_17] : memref<1x1x512xf32, #tpu.memory_space<vmem>>, vector<1x1x512xf32>
    tpu.vector_store %arg4[%c0_15, %c0_16, %c0_17], %40 {strides = array<i32>} : memref<1x1x512xf32, #tpu.memory_space<vmem>>, vector<1x1x512xf32>,
    return
  }
  func.func @transform_0(%arg0: i32) -> (i32, i32, i32) {
    %c0_i32 = arith.constant 0 : i32
    %c0_i32_0 = arith.constant 0 : i32
    %c0_i32_1 = arith.constant 0 : i32
    return %arg0, %c0_i32, %c0_i32_0 : i32, i32, i32
  }
  func.func @transform_1(%arg0: i32) -> (i32, i32) {
    %c0_i32 = arith.constant 0 : i32
    %c0_i32_0 = arith.constant 0 : i32
    %c0_i32_1 = arith.constant 0 : i32
    return %c0_i32, %c0_i32_0 : i32, i32
  }
  func.func @transform_2(%arg0: i32) -> (i32, i32) {
    %c0_i32 = arith.constant 0 : i32
    %c0_i32_0 = arith.constant 0 : i32
    %c0_i32_1 = arith.constant 0 : i32
    return %c0_i32, %c0_i32_0 : i32, i32
  }
  func.func @transform_3(%arg0: i32) -> (i32, i32, i32) {
    %c0_i32 = arith.constant 0 : i32
    %c0_i32_0 = arith.constant 0 : i32
    %c0_i32_1 = arith.constant 0 : i32
    return %arg0, %c0_i32, %c0_i32_0 : i32, i32, i32
  }
}

</mosaic_0001>

<llo_original>
// kernel: conv_graph_sc_forward.1
$region0: #{conv_graph_sc_forward.1}
  #allocation0 [shape = 'u32[]', space=smem, size = 0x4, offset = 0x4, fixed_abs, tag = 'smem constant byte address 0x4 - core index']
  #allocation1 [shape = 'u32[72,128]{1,0:T(1,128)}', space=vmem, size = 0x9000, scoped, tag = 'internal scratch']
  %s0 = inlined_call_operand.vmem [shape: f32[2,4,512], index: 0, kind: input, shape index: {}]
  %s1 = inlined_call_operand.vmem [shape: bf16[512,1024], index: 1, kind: input, shape index: {}]
  %s2 = inlined_call_operand.vmem [shape: f32[1,1024], index: 2, kind: input, shape index: {}]
  %s3 = inlined_call_operand.vmem [shape: f32[2,1,512], index: 3, kind: output, shape index: {}]
  %s4 = sld [smem:[#allocation0]]
  $region45: #{conv_graph_sc_forward.1} parent=0
    _
  %s6 = ssub.s32 1, %s4
  %s7 = scalar_select 0, %s6, %s4
  loop: start=0, step=1, limit=4
  $region2: #{conv_graph_sc_forward.1} parent=0 // loop_pre_header
    _
  $region3: #{conv_graph_sc_forward.1} parent=0 // loop_header
    %s9 = sphi 0, %s13
    %p10 = scmp.ge.s32.totalorder %s9, 4
    %s19 = sphi 0, %s21
    %s22 = sphi 0, %s19
    %s23 = sphi 0, %s22
    %s39 = sphi 0, %s23
    %s43 = sphi 0, %s43
    %s45 = sphi 0, %s43
    %s46 = sphi 0, %s45
    %s60 = sphi 0, %s46
    %s64 = sphi 0, %s64
    %s66 = sphi 0, %s64
    %s67 = sphi 0, %s66
    %s81 = sphi 0, %s67
    %s87 = sphi 0, %s89
    %s90 = sphi 0, %s87
    %s91 = sphi 0, %s90
    %s107 = sphi 0, %s91
  $region4: #{conv_graph_sc_forward.1} parent=0 // loop_header_branch
    %12 = sbr.rel (%p10) target = $region8
  $region5: #{conv_graph_sc_forward.1} parent=0 // loop_body
    %s14 = ssub.s32 %s9, 1
    %s15 = ssub.s32 %s9, 2
    %s16 = sadd.s32 %s9, 1
    %s17 = ssub.s32 %s9, %s16
    %p18 = scmp.eq.s32.totalorder %s17, 0
    %s20 = sadd.s32 %s19, 1
    %s21 = scalar_select %p18, %s19, %s20
    %p24 = pneg %p18
    %p25 = scmp.eq.s32.totalorder %s9, 1
    %p26 = por %p24, %p25
    %p27 = scmp.ne.s32.totalorder %s19, %s22
    %p28 = scmp.eq.s32.totalorder %s9, 0
    %p29 = por %p27, %p28
    %p30 = scmp.ne.s32.totalorder %s19, %s22
    %p31 = scmp.eq.s32.totalorder %s14, 1
    %p32 = por %p30, %p31
    %p33 = scmp.ne.s32.totalorder %s22, %s23
    %p34 = scmp.eq.s32.totalorder %s14, 0
    %p35 = por %p33, %p34
    %p36 = scmp.ne.s32.totalorder %s22, %s23
    %p37 = scmp.eq.s32.totalorder %s15, 1
    %p38 = por %p36, %p37
    %p40 = scmp.ne.s32.totalorder %s23, %s39
    %p41 = scmp.eq.s32.totalorder %s15, 0
    %p42 = por %p40, %p41
    %s44 = sadd.s32 %s43, 1
    %p47 = scmp.eq.s32.totalorder %s9, 1
    %p48 = scmp.ne.s32.totalorder %s43, %s45
    %p49 = scmp.eq.s32.totalorder %s9, 0
    %p50 = por %p48, %p49
    %p51 = scmp.ne.s32.totalorder %s43, %s45
    %p52 = scmp.eq.s32.totalorder %s14, 1
    %p53 = por %p51, %p52
    %p54 = scmp.ne.s32.totalorder %s45, %s46
    %p55 = scmp.eq.s32.totalorder %s14, 0
    %p56 = por %p54, %p55
    %p57 = scmp.ne.s32.totalorder %s45, %s46
    %p58 = scmp.eq.s32.totalorder %s15, 1
    %p59 = por %p57, %p58
    %p61 = scmp.ne.s32.totalorder %s46, %s60
    %p62 = scmp.eq.s32.totalorder %s15, 0
    %p63 = por %p61, %p62
    %s65 = sadd.s32 %s64, 1
    %p68 = scmp.eq.s32.totalorder %s9, 1
    %p69 = scmp.ne.s32.totalorder %s64, %s66
    %p70 = scmp.eq.s32.totalorder %s9, 0
    %p71 = por %p69, %p70
    %p72 = scmp.ne.s32.totalorder %s64, %s66
    %p73 = scmp.eq.s32.totalorder %s14, 1
    %p74 = por %p72, %p73
    %p75 = scmp.ne.s32.totalorder %s66, %s67
    %p76 = scmp.eq.s32.totalorder %s14, 0
    %p77 = por %p75, %p76
    %p78 = scmp.ne.s32.totalorder %s66, %s67
    %p79 = scmp.eq.s32.totalorder %s15, 1
    %p80 = por %p78, %p79
    %p82 = scmp.ne.s32.totalorder %s67, %s81
    %p83 = scmp.eq.s32.totalorder %s15, 0
    %p84 = por %p82, %p83
    %s85 = ssub.s32 %s9, %s16
    %p86 = scmp.eq.s32.totalorder %s85, 0
    %s88 = sadd.s32 %s87, 1
    %s89 = scalar_select %p86, %s87, %s88
    %p92 = pneg %p86
    %p93 = scmp.eq.s32.totalorder %s9, 1
    %p94 = por %p92, %p93
    %p95 = scmp.ne.s32.totalorder %s87, %s90
    %p96 = scmp.eq.s32.totalorder %s9, 0
    %p97 = por %p95, %p96
    %p98 = scmp.ne.s32.totalorder %s87, %s90
    %p99 = scmp.eq.s32.totalorder %s14, 1
    %p100 = por %p98, %p99
    %p101 = scmp.ne.s32.totalorder %s90, %s91
    %p102 = scmp.eq.s32.totalorder %s14, 0
    %p103 = por %p101, %p102
    %p104 = scmp.ne.s32.totalorder %s90, %s91
    %p105 = scmp.eq.s32.totalorder %s15, 1
    %p106 = por %p104, %p105
    %p108 = scmp.ne.s32.totalorder %s91, %s107
    %p109 = scmp.eq.s32.totalorder %s15, 0
    %p110 = por %p108, %p109
    %p111 = scmp.le.s32.totalorder 1, %s9
    %p112 = scmp.lt.s32.totalorder %s9, 3
    %p113 = pnand %p111, %p112
    %p114 = pneg %p113
    // Predicated region
    $region9: #{conv_graph_sc_forward.1} parent=5 // pred_check
      _
    $region10: #{conv_graph_sc_forward.1} parent=5 // pred_check_branch
      %116 = sbr.rel (%p113) target = $region12
    $region11: #{conv_graph_sc_forward.1} parent=5 // pred_region
      %s117 = ssub.s32 %s9, 1
      // Predicated region
      $region13: #{conv_graph_sc_forward.1} parent=11 // pred_check
        %p118 = pneg %p56
      $region14: #{conv_graph_sc_forward.1} parent=11 // pred_check_branch
        %120 = sbr.rel (%p118) target = $region16
      $region15: #{conv_graph_sc_forward.1} parent=11 // pred_region
        _
      $region16: #{conv_graph_sc_forward.1} parent=11 // pred_fallthru
        _
      // Predicated region
      $region17: #{conv_graph_sc_forward.1} parent=11 // pred_check
        %p121 = pneg %p77
      $region18: #{conv_graph_sc_forward.1} parent=11 // pred_check_branch
        %123 = sbr.rel (%p121) target = $region20
      $region19: #{conv_graph_sc_forward.1} parent=11 // pred_region
        _
      $region20: #{conv_graph_sc_forward.1} parent=11 // pred_fallthru
        _
    $region12: #{conv_graph_sc_forward.1} parent=5 // pred_fallthru
      _
    %p124 = scmp.lt.s32.totalorder %s9, 2
    // Predicated region
    $region21: #{conv_graph_sc_forward.1} parent=5 // pred_check
      %p125 = pneg %p124
    $region22: #{conv_graph_sc_forward.1} parent=5 // pred_check_branch
      %127 = sbr.rel (%p125) target = $region24
    $region23: #{conv_graph_sc_forward.1} parent=5 // pred_region
      // Predicated region
      $region25: #{conv_graph_sc_forward.1} parent=23 // pred_check
        %p128 = pneg %p29
      $region26: #{conv_graph_sc_forward.1} parent=23 // pred_check_branch
        %130 = sbr.rel (%p128) target = $region28
      $region27: #{conv_graph_sc_forward.1} parent=23 // pred_region
        %p131 = scmp.lt.s32.totalorder %s9, 1
        %s132 = scalar_select %p131, %s9, 1
        %s133 = smul.addr %s132, 4
        %s134 = smul.addr %s133, 4
        %s135 = scalar_lea.vmem %s0, %s134
      $region28: #{conv_graph_sc_forward.1} parent=23 // pred_fallthru
        _
    $region24: #{conv_graph_sc_forward.1} parent=5 // pred_fallthru
      _
    %p136 = scmp.le.s32.totalorder 1, %s9
    %p137 = scmp.lt.s32.totalorder %s9, 3
    %p138 = pnand %p136, %p137
    %p139 = pneg %p138
    // Predicated region
    $region29: #{conv_graph_sc_forward.1} parent=5 // pred_check
      _
    $region30: #{conv_graph_sc_forward.1} parent=5 // pred_check_branch
      %141 = sbr.rel (%p138) target = $region32
    $region31: #{conv_graph_sc_forward.1} parent=5 // pred_region
      %s142 = ssub.s32 %s9, 1
      %p143 = scmp.lt.s32.totalorder %s14, 1
      %s144 = scalar_select %p143, %s14, 1
      %s145 = smul.addr %s144, 4
      %s146 = smul.addr %s145, 4
      %s147 = scalar_lea.vmem %s0, %s146
      %p148 = pneg %p35
      %p149 = pneg %p32
      %p150 = pneg %p56
      %p151 = pneg %p53
      %p152 = pneg %p77
      %p153 = pneg %p74
      %p154 = pneg %p103
      %p155 = pneg %p100
      %p156 = scmp.lt.s32.totalorder %s14, 1
      %s157 = scalar_select %p156, %s14, 1
      %s158 = smul.addr %s157, 4
      %s159 = scalar_lea.vmem %s3, %s158
      %p160 = scmp.lt.s32.totalorder %s14, 1
      %s161 = scalar_select %p160, %s14, 1
      %s162 = smul.addr %s161, 4
      %s163 = smul.addr %s162, 4
      %s164 = scalar_lea.vmem %s0, %s163
      %p165 = scmp.lt.s32.totalorder %s14, 1
      %s166 = scalar_select %p165, %s14, 1
      %s167 = smul.addr %s166, 4
      %s168 = scalar_lea.vmem %s3, %s167
      %v170 = vld [vmem:[%s164] sm:$0xff]
      %v171 = vld [vmem:[%s164 + $0x8] sm:$0xff]
      %174 = vst [vmem:[#allocation1] ss:$2 sm:$0xff] %v170
      %s175 = scalar_lea.vmem [#allocation1], 16
      %176 = vst [vmem:[%s175] ss:$2 sm:$0xff] %v171
      %v177 = vld.sshfl [vmem:[#allocation1] sm:$0xff pattern:$0x75316420]
      %v178 = vld.sshfl [vmem:[#allocation1 + $0x8] sm:$0xff pattern:$0x75316420]
      %v179 = vld.sshfl [vmem:[#allocation1 + $0x10] sm:$0xff pattern:$0x75316420]
      %v180 = vld.sshfl [vmem:[#allocation1 + $0x18] sm:$0xff pattern:$0x75316420]
      %v185 = vpack.c.bf16 %v178, %v177
      %v186 = vpack.c.bf16 %v180, %v179
      %v187 = vld [vmem:[%s1] sm:$0xff]
      %v188 = vld [vmem:[%s1 + $0x8] sm:$0xff]
      %v189 = vld [vmem:[%s1 + $0x10] sm:$0xff]
      %v190 = vld [vmem:[%s1 + $0x18] sm:$0xff]
      %v191 = vld [vmem:[%s1 + $0x20] sm:$0xff]
      %v192 = vld [vmem:[%s1 + $0x28] sm:$0xff]
      %v193 = vld [vmem:[%s1 + $0x30] sm:$0xff]
      %v194 = vld [vmem:[%s1 + $0x38] sm:$0xff]
      %v195 = vld [vmem:[%s1 + $0x40] sm:$0xff]
      %v196 = vld [vmem:[%s1 + $0x48] sm:$0xff]
      %v197 = vld [vmem:[%s1 + $0x50] sm:$0xff]
      %v198 = vld [vmem:[%s1 + $0x58] sm:$0xff]
      %v199 = vld [vmem:[%s1 + $0x60] sm:$0xff]
      %v200 = vld [vmem:[%s1 + $0x68] sm:$0xff]
      %v201 = vld [vmem:[%s1 + $0x70] sm:$0xff]
      %v202 = vld [vmem:[%s1 + $0x78] sm:$0xff]
      %v203 = vld [vmem:[%s1 + $0x80] sm:$0xff]
      %v204 = vld [vmem:[%s1 + $0x88] sm:$0xff]
      %v205 = vld [vmem:[%s1 + $0x90] sm:$0xff]
      %v206 = vld [vmem:[%s1 + $0x98] sm:$0xff]
      %v207 = vld [vmem:[%s1 + $0xa0] sm:$0xff]
      %v208 = vld [vmem:[%s1 + $0xa8] sm:$0xff]
      %v209 = vld [vmem:[%s1 + $0xb0] sm:$0xff]
      %v210 = vld [vmem:[%s1 + $0xb8] sm:$0xff]
      %v211 = vld [vmem:[%s1 + $0xc0] sm:$0xff]
      %v212 = vld [vmem:[%s1 + $0xc8] sm:$0xff]
      %v213 = vld [vmem:[%s1 + $0xd0] sm:$0xff]
      %v214 = vld [vmem:[%s1 + $0xd8] sm:$0xff]
      %v215 = vld [vmem:[%s1 + $0xe0] sm:$0xff]
      %v216 = vld [vmem:[%s1 + $0xe8] sm:$0xff]
      %v217 = vld [vmem:[%s1 + $0xf0] sm:$0xff]
      %v218 = vld [vmem:[%s1 + $0xf8] sm:$0xff]
      %v219 = vld [vmem:[%s1 + $0x100] sm:$0xff]
      %v220 = vld [vmem:[%s1 + $0x108] sm:$0xff]
      %v221 = vld [vmem:[%s1 + $0x110] sm:$0xff]
      %v222 = vld [vmem:[%s1 + $0x118] sm:$0xff]
      %v223 = vld [vmem:[%s1 + $0x120] sm:$0xff]
      %v224 = vld [vmem:[%s1 + $0x128] sm:$0xff]
      %v225 = vld [vmem:[%s1 + $0x130] sm:$0xff]
      %v226 = vld [vmem:[%s1 + $0x138] sm:$0xff]
      %v227 = vld [vmem:[%s1 + $0x140] sm:$0xff]
      %v228 = vld [vmem:[%s1 + $0x148] sm:$0xff]
      %v229 = vld [vmem:[%s1 + $0x150] sm:$0xff]
      %v230 = vld [vmem:[%s1 + $0x158] sm:$0xff]
      %v231 = vld [vmem:[%s1 + $0x160] sm:$0xff]
      %v232 = vld [vmem:[%s1 + $0x168] sm:$0xff]
      %v233 = vld [vmem:[%s1 + $0x170] sm:$0xff]
      %v234 = vld [vmem:[%s1 + $0x178] sm:$0xff]
      %v235 = vld [vmem:[%s1 + $0x180] sm:$0xff]
      %v236 = vld [vmem:[%s1 + $0x188] sm:$0xff]
      %v237 = vld [vmem:[%s1 + $0x190] sm:$0xff]
      %v238 = vld [vmem:[%s1 + $0x198] sm:$0xff]
      %v239 = vld [vmem:[%s1 + $0x1a0] sm:$0xff]
      %v240 = vld [vmem:[%s1 + $0x1a8] sm:$0xff]
      %v241 = vld [vmem:[%s1 + $0x1b0] sm:$0xff]
      %v242 = vld [vmem:[%s1 + $0x1b8] sm:$0xff]
      %v243 = vld [vmem:[%s1 + $0x1c0] sm:$0xff]
      %v244 = vld [vmem:[%s1 + $0x1c8] sm:$0xff]
      %v245 = vld [vmem:[%s1 + $0x1d0] sm:$0xff]
      %v246 = vld [vmem:[%s1 + $0x1d8] sm:$0xff]
      %v247 = vld [vmem:[%s1 + $0x1e0] sm:$0xff]
      %v248 = vld [vmem:[%s1 + $0x1e8] sm:$0xff]
      %v249 = vld [vmem:[%s1 + $0x1f0] sm:$0xff]
      %v250 = vld [vmem:[%s1 + $0x1f8] sm:$0xff]
      %v251 = vld [vmem:[%s1 + $0x200] sm:$0xff]
      %v252 = vld [vmem:[%s1 + $0x208] sm:$0xff]
      %v253 = vld [vmem:[%s1 + $0x210] sm:$0xff]
      %v254 = vld [vmem:[%s1 + $0x218] sm:$0xff]
      %v255 = vld [vmem:[%s1 + $0x220] sm:$0xff]
      %v256 = vld [vmem:[%s1 + $0x228] sm:$0xff]
      %v257 = vld [vmem:[%s1 + $0x230] sm:$0xff]
      %v258 = vld [vmem:[%s1 + $0x238] sm:$0xff]
      %v259 = vld [vmem:[%s1 + $0x240] sm:$0xff]
      %v260 = vld [vmem:[%s1 + $0x248] sm:$0xff]
      %v261 = vld [vmem:[%s1 + $0x250] sm:$0xff]
      %v262 = vld [vmem:[%s1 + $0x258] sm:$0xff]
      %v263 = vld [vmem:[%s1 + $0x260] sm:$0xff]
      %v264 = vld [vmem:[%s1 + $0x268] sm:$0xff]
      %v265 = vld [vmem:[%s1 + $0x270] sm:$0xff]
      %v266 = vld [vmem:[%s1 + $0x278] sm:$0xff]
      %v267 = vld [vmem:[%s1 + $0x280] sm:$0xff]
      %v268 = vld [vmem:[%s1 + $0x288] sm:$0xff]
      %v269 = vld [vmem:[%s1 + $0x290] sm:$0xff]
      %v270 = vld [vmem:[%s1 + $0x298] sm:$0xff]
      %v271 = vld [vmem:[%s1 + $0x2a0] sm:$0xff]
      %v272 = vld [vmem:[%s1 + $0x2a8] sm:$0xff]
      %v273 = vld [vmem:[%s1 + $0x2b0] sm:$0xff]
      %v274 = vld [vmem:[%s1 + $0x2b8] sm:$0xff]
      %v275 = vld [vmem:[%s1 + $0x2c0] sm:$0xff]
      %v276 = vld [vmem:[%s1 + $0x2c8] sm:$0xff]
      %v277 = vld [vmem:[%s1 + $0x2d0] sm:$0xff]
      %v278 = vld [vmem:[%s1 + $0x2d8] sm:$0xff]
      %v279 = vld [vmem:[%s1 + $0x2e0] sm:$0xff]
      %v280 = vld [vmem:[%s1 + $0x2e8] sm:$0xff]
      %v281 = vld [vmem:[%s1 + $0x2f0] sm:$0xff]
      %v282 = vld [vmem:[%s1 + $0x2f8] sm:$0xff]
      %v283 = vld [vmem:[%s1 + $0x300] sm:$0xff]
      %v284 = vld [vmem:[%s1 + $0x308] sm:$0xff]
      %v285 = vld [vmem:[%s1 + $0x310] sm:$0xff]
      %v286 = vld [vmem:[%s1 + $0x318] sm:$0xff]
      %v287 = vld [vmem:[%s1 + $0x320] sm:$0xff]
      %v288 = vld [vmem:[%s1 + $0x328] sm:$0xff]
      %v289 = vld [vmem:[%s1 + $0x330] sm:$0xff]
      %v290 = vld [vmem:[%s1 + $0x338] sm:$0xff]
      %v291 = vld [vmem:[%s1 + $0x340] sm:$0xff]
      %v292 = vld [vmem:[%s1 + $0x348] sm:$0xff]
      %v293 = vld [vmem:[%s1 + $0x350] sm:$0xff]
      %v294 = vld [vmem:[%s1 + $0x358] sm:$0xff]
      %v295 = vld [vmem:[%s1 + $0x360] sm:$0xff]
      %v296 = vld [vmem:[%s1 + $0x368] sm:$0xff]
      %v297 = vld [vmem:[%s1 + $0x370] sm:$0xff]
      %v298 = vld [vmem:[%s1 + $0x378] sm:$0xff]
      %v299 = vld [vmem:[%s1 + $0x380] sm:$0xff]
      %v300 = vld [vmem:[%s1 + $0x388] sm:$0xff]
      %v301 = vld [vmem:[%s1 + $0x390] sm:$0xff]
      %v302 = vld [vmem:[%s1 + $0x398] sm:$0xff]
      %v303 = vld [vmem:[%s1 + $0x3a0] sm:$0xff]
      %v304 = vld [vmem:[%s1 + $0x3a8] sm:$0xff]
      %v305 = vld [vmem:[%s1 + $0x3b0] sm:$0xff]
      %v306 = vld [vmem:[%s1 + $0x3b8] sm:$0xff]
      %v307 = vld [vmem:[%s1 + $0x3c0] sm:$0xff]
      %v308 = vld [vmem:[%s1 + $0x3c8] sm:$0xff]
      %v309 = vld [vmem:[%s1 + $0x3d0] sm:$0xff]
      %v310 = vld [vmem:[%s1 + $0x3d8] sm:$0xff]
      %v311 = vld [vmem:[%s1 + $0x3e0] sm:$0xff]
      %v312 = vld [vmem:[%s1 + $0x3e8] sm:$0xff]
      %v313 = vld [vmem:[%s1 + $0x3f0] sm:$0xff]
      %v314 = vld [vmem:[%s1 + $0x3f8] sm:$0xff]
      %v315 = vld [vmem:[%s1 + $0x400] sm:$0xff]
      %v316 = vld [vmem:[%s1 + $0x408] sm:$0xff]
      %v317 = vld [vmem:[%s1 + $0x410] sm:$0xff]
      %v318 = vld [vmem:[%s1 + $0x418] sm:$0xff]
      %v319 = vld [vmem:[%s1 + $0x420] sm:$0xff]
      %v320 = vld [vmem:[%s1 + $0x428] sm:$0xff]
      %v321 = vld [vmem:[%s1 + $0x430] sm:$0xff]
      %v322 = vld [vmem:[%s1 + $0x438] sm:$0xff]
      %v323 = vld [vmem:[%s1 + $0x440] sm:$0xff]
      %v324 = vld [vmem:[%s1 + $0x448] sm:$0xff]
      %v325 = vld [vmem:[%s1 + $0x450] sm:$0xff]
      %v326 = vld [vmem:[%s1 + $0x458] sm:$0xff]
      %v327 = vld [vmem:[%s1 + $0x460] sm:$0xff]
      %v328 = vld [vmem:[%s1 + $0x468] sm:$0xff]
      %v329 = vld [vmem:[%s1 + $0x470] sm:$0xff]
      %v330 = vld [vmem:[%s1 + $0x478] sm:$0xff]
      %v331 = vld [vmem:[%s1 + $0x480] sm:$0xff]
      %v332 = vld [vmem:[%s1 + $0x488] sm:$0xff]
      %v333 = vld [vmem:[%s1 + $0x490] sm:$0xff]
      %v334 = vld [vmem:[%s1 + $0x498] sm:$0xff]
      %v335 = vld [vmem:[%s1 + $0x4a0] sm:$0xff]
      %v336 = vld [vmem:[%s1 + $0x4a8] sm:$0xff]
      %v337 = vld [vmem:[%s1 + $0x4b0] sm:$0xff]
      %v338 = vld [vmem:[%s1 + $0x4b8] sm:$0xff]
      %v339 = vld [vmem:[%s1 + $0x4c0] sm:$0xff]
      %v340 = vld [vmem:[%s1 + $0x4c8] sm:$0xff]
      %v341 = vld [vmem:[%s1 + $0x4d0] sm:$0xff]
      %v342 = vld [vmem:[%s1 + $0x4d8] sm:$0xff]
      %v343 = vld [vmem:[%s1 + $0x4e0] sm:$0xff]
      %v344 = vld [vmem:[%s1 + $0x4e8] sm:$0xff]
      %v345 = vld [vmem:[%s1 + $0x4f0] sm:$0xff]
      %v346 = vld [vmem:[%s1 + $0x4f8] sm:$0xff]
      %v347 = vld [vmem:[%s1 + $0x500] sm:$0xff]
      %v348 = vld [vmem:[%s1 + $0x508] sm:$0xff]
      %v349 = vld [vmem:[%s1 + $0x510] sm:$0xff]
      %v350 = vld [vmem:[%s1 + $0x518] sm:$0xff]
      %v351 = vld [vmem:[%s1 + $0x520] sm:$0xff]
      %v352 = vld [vmem:[%s1 + $0x528] sm:$0xff]
      %v353 = vld [vmem:[%s1 + $0x530] sm:$0xff]
      %v354 = vld [vmem:[%s1 + $0x538] sm:$0xff]
      %v355 = vld [vmem:[%s1 + $0x540] sm:$0xff]
      %v356 = vld [vmem:[%s1 + $0x548] sm:$0xff]
      %v357 = vld [vmem:[%s1 + $0x550] sm:$0xff]
      %v358 = vld [vmem:[%s1 + $0x558] sm:$0xff]
      %v359 = vld [vmem:[%s1 + $0x560] sm:$0xff]
      %v360 = vld [vmem:[%s1 + $0x568] sm:$0xff]
      %v361 = vld [vmem:[%s1 + $0x570] sm:$0xff]
      %v362 = vld [vmem:[%s1 + $0x578] sm:$0xff]
      %v363 = vld [vmem:[%s1 + $0x580] sm:$0xff]
      %v364 = vld [vmem:[%s1 + $0x588] sm:$0xff]
      %v365 = vld [vmem:[%s1 + $0x590] sm:$0xff]
      %v366 = vld [vmem:[%s1 + $0x598] sm:$0xff]
      %v367 = vld [vmem:[%s1 + $0x5a0] sm:$0xff]
      %v368 = vld [vmem:[%s1 + $0x5a8] sm:$0xff]
      %v369 = vld [vmem:[%s1 + $0x5b0] sm:$0xff]
      %v370 = vld [vmem:[%s1 + $0x5b8] sm:$0xff]
      %v371 = vld [vmem:[%s1 + $0x5c0] sm:$0xff]
      %v372 = vld [vmem:[%s1 + $0x5c8] sm:$0xff]
      %v373 = vld [vmem:[%s1 + $0x5d0] sm:$0xff]
      %v374 = vld [vmem:[%s1 + $0x5d8] sm:$0xff]
      %v375 = vld [vmem:[%s1 + $0x5e0] sm:$0xff]
      %v376 = vld [vmem:[%s1 + $0x5e8] sm:$0xff]
      %v377 = vld [vmem:[%s1 + $0x5f0] sm:$0xff]
      %v378 = vld [vmem:[%s1 + $0x5f8] sm:$0xff]
      %v379 = vld [vmem:[%s1 + $0x600] sm:$0xff]
      %v380 = vld [vmem:[%s1 + $0x608] sm:$0xff]
      %v381 = vld [vmem:[%s1 + $0x610] sm:$0xff]
      %v382 = vld [vmem:[%s1 + $0x618] sm:$0xff]
      %v383 = vld [vmem:[%s1 + $0x620] sm:$0xff]
      %v384 = vld [vmem:[%s1 + $0x628] sm:$0xff]
      %v385 = vld [vmem:[%s1 + $0x630] sm:$0xff]
      %v386 = vld [vmem:[%s1 + $0x638] sm:$0xff]
      %v387 = vld [vmem:[%s1 + $0x640] sm:$0xff]
      %v388 = vld [vmem:[%s1 + $0x648] sm:$0xff]
      %v389 = vld [vmem:[%s1 + $0x650] sm:$0xff]
      %v390 = vld [vmem:[%s1 + $0x658] sm:$0xff]
      %v391 = vld [vmem:[%s1 + $0x660] sm:$0xff]
      %v392 = vld [vmem:[%s1 + $0x668] sm:$0xff]
      %v393 = vld [vmem:[%s1 + $0x670] sm:$0xff]
      %v394 = vld [vmem:[%s1 + $0x678] sm:$0xff]
      %v395 = vld [vmem:[%s1 + $0x680] sm:$0xff]
      %v396 = vld [vmem:[%s1 + $0x688] sm:$0xff]
      %v397 = vld [vmem:[%s1 + $0x690] sm:$0xff]
      %v398 = vld [vmem:[%s1 + $0x698] sm:$0xff]
      %v399 = vld [vmem:[%s1 + $0x6a0] sm:$0xff]
      %v400 = vld [vmem:[%s1 + $0x6a8] sm:$0xff]
      %v401 = vld [vmem:[%s1 + $0x6b0] sm:$0xff]
      %v402 = vld [vmem:[%s1 + $0x6b8] sm:$0xff]
      %v403 = vld [vmem:[%s1 + $0x6c0] sm:$0xff]
      %v404 = vld [vmem:[%s1 + $0x6c8] sm:$0xff]
      %v405 = vld [vmem:[%s1 + $0x6d0] sm:$0xff]
      %v406 = vld [vmem:[%s1 + $0x6d8] sm:$0xff]
      %v407 = vld [vmem:[%s1 + $0x6e0] sm:$0xff]
      %v408 = vld [vmem:[%s1 + $0x6e8] sm:$0xff]
      %v409 = vld [vmem:[%s1 + $0x6f0] sm:$0xff]
      %v410 = vld [vmem:[%s1 + $0x6f8] sm:$0xff]
      %v411 = vld [vmem:[%s1 + $0x700] sm:$0xff]
      %v412 = vld [vmem:[%s1 + $0x708] sm:$0xff]
      %v413 = vld [vmem:[%s1 + $0x710] sm:$0xff]
      %v414 = vld [vmem:[%s1 + $0x718] sm:$0xff]
      %v415 = vld [vmem:[%s1 + $0x720] sm:$0xff]
      %v416 = vld [vmem:[%s1 + $0x728] sm:$0xff]
      %v417 = vld [vmem:[%s1 + $0x730] sm:$0xff]
      %v418 = vld [vmem:[%s1 + $0x738] sm:$0xff]
      %v419 = vld [vmem:[%s1 + $0x740] sm:$0xff]
      %v420 = vld [vmem:[%s1 + $0x748] sm:$0xff]
      %v421 = vld [vmem:[%s1 + $0x750] sm:$0xff]
      %v422 = vld [vmem:[%s1 + $0x758] sm:$0xff]
      %v423 = vld [vmem:[%s1 + $0x760] sm:$0xff]
      %v424 = vld [vmem:[%s1 + $0x768] sm:$0xff]
      %v425 = vld [vmem:[%s1 + $0x770] sm:$0xff]
      %v426 = vld [vmem:[%s1 + $0x778] sm:$0xff]
      %v427 = vld [vmem:[%s1 + $0x780] sm:$0xff]
      %v428 = vld [vmem:[%s1 + $0x788] sm:$0xff]
      %v429 = vld [vmem:[%s1 + $0x790] sm:$0xff]
      %v430 = vld [vmem:[%s1 + $0x798] sm:$0xff]
      %v431 = vld [vmem:[%s1 + $0x7a0] sm:$0xff]
      %v432 = vld [vmem:[%s1 + $0x7a8] sm:$0xff]
      %v433 = vld [vmem:[%s1 + $0x7b0] sm:$0xff]
      %v434 = vld [vmem:[%s1 + $0x7b8] sm:$0xff]
      %v435 = vld [vmem:[%s1 + $0x7c0] sm:$0xff]
      %v436 = vld [vmem:[%s1 + $0x7c8] sm:$0xff]
      %v437 = vld [vmem:[%s1 + $0x7d0] sm:$0xff]
      %v438 = vld [vmem:[%s1 + $0x7d8] sm:$0xff]
      %v439 = vld [vmem:[%s1 + $0x7e0] sm:$0xff]
      %v440 = vld [vmem:[%s1 + $0x7e8] sm:$0xff]
      %v441 = vld [vmem:[%s1 + $0x7f0] sm:$0xff]
      %v442 = vld [vmem:[%s1 + $0x7f8] sm:$0xff]
      %v443 = vld [vmem:[%s2] sm:$0xff]
      %v445 = vperm.slane %v443, 0
      %v446 = vperm.slane %v443, 1
      %v447 = vperm.slane %v443, 2
      %v448 = vperm.slane %v443, 3
      %v449 = vperm.slane %v443, 4
      %v450 = vperm.slane %v443, 5
      %v451 = vperm.slane %v443, 6
      %v452 = vperm.slane %v443, 7
      %v463 = vunpack.c.l.b16 %v185
      %v464 = vunpack.c.h.b16 %v185
      %v465 = vunpack.c.l.b16 %v186
      %v466 = vunpack.c.h.b16 %v186
      %v467 = vpack.c.b16 %v463, %v463
      %v468 = vpack.c.b16 %v464, %v464
      %v469 = vpack.c.b16 %v465, %v465
      %v470 = vpack.c.b16 %v466, %v466
      %v731 = vunpack.c.l.b16 %v187
      %v732 = vunpack.c.h.b16 %v187
      %v733 = vunpack.c.l.b16 %v188
      %v734 = vunpack.c.h.b16 %v188
      %v735 = vunpack.c.l.b16 %v189
      %v736 = vunpack.c.h.b16 %v189
      %v737 = vunpack.c.l.b16 %v190
      %v738 = vunpack.c.h.b16 %v190
      %v739 = vunpack.c.l.b16 %v191
      %v740 = vunpack.c.h.b16 %v191
      %v741 = vunpack.c.l.b16 %v192
      %v742 = vunpack.c.h.b16 %v192
      %v743 = vunpack.c.l.b16 %v193
      %v744 = vunpack.c.h.b16 %v193
      %v745 = vunpack.c.l.b16 %v194
      %v746 = vunpack.c.h.b16 %v194
      %v747 = vunpack.c.l.b16 %v195
      %v748 = vunpack.c.h.b16 %v195
      %v749 = vunpack.c.l.b16 %v196
      %v750 = vunpack.c.h.b16 %v196
      %v751 = vunpack.c.l.b16 %v197
      %v752 = vunpack.c.h.b16 %v197
      %v753 = vunpack.c.l.b16 %v198
      %v754 = vunpack.c.h.b16 %v198
      %v755 = vunpack.c.l.b16 %v199
      %v756 = vunpack.c.h.b16 %v199
      %v757 = vunpack.c.l.b16 %v200
      %v758 = vunpack.c.h.b16 %v200
      %v759 = vunpack.c.l.b16 %v201
      %v760 = vunpack.c.h.b16 %v201
      %v761 = vunpack.c.l.b16 %v202
      %v762 = vunpack.c.h.b16 %v202
      %v763 = vunpack.c.l.b16 %v203
      %v764 = vunpack.c.h.b16 %v203
      %v765 = vunpack.c.l.b16 %v204
      %v766 = vunpack.c.h.b16 %v204
      %v767 = vunpack.c.l.b16 %v205
      %v768 = vunpack.c.h.b16 %v205
      %v769 = vunpack.c.l.b16 %v206
      %v770 = vunpack.c.h.b16 %v206
      %v771 = vunpack.c.l.b16 %v207
      %v772 = vunpack.c.h.b16 %v207
      %v773 = vunpack.c.l.b16 %v208
      %v774 = vunpack.c.h.b16 %v208
      %v775 = vunpack.c.l.b16 %v209
      %v776 = vunpack.c.h.b16 %v209
      %v777 = vunpack.c.l.b16 %v210
      %v778 = vunpack.c.h.b16 %v210
      %v779 = vunpack.c.l.b16 %v211
      %v780 = vunpack.c.h.b16 %v211
      %v781 = vunpack.c.l.b16 %v212
      %v782 = vunpack.c.h.b16 %v212
      %v783 = vunpack.c.l.b16 %v213
      %v784 = vunpack.c.h.b16 %v213
      %v785 = vunpack.c.l.b16 %v214
      %v786 = vunpack.c.h.b16 %v214
      %v787 = vunpack.c.l.b16 %v215
      %v788 = vunpack.c.h.b16 %v215
      %v789 = vunpack.c.l.b16 %v216
      %v790 = vunpack.c.h.b16 %v216
      %v791 = vunpack.c.l.b16 %v217
      %v792 = vunpack.c.h.b16 %v217
      %v793 = vunpack.c.l.b16 %v218
      %v794 = vunpack.c.h.b16 %v218
      %v795 = vunpack.c.l.b16 %v219
      %v796 = vunpack.c.h.b16 %v219
      %v797 = vunpack.c.l.b16 %v220
      %v798 = vunpack.c.h.b16 %v220
      %v799 = vunpack.c.l.b16 %v221
      %v800 = vunpack.c.h.b16 %v221
      %v801 = vunpack.c.l.b16 %v222
      %v802 = vunpack.c.h.b16 %v222
      %v803 = vunpack.c.l.b16 %v223
      %v804 = vunpack.c.h.b16 %v223
      %v805 = vunpack.c.l.b16 %v224
      %v806 = vunpack.c.h.b16 %v224
      %v807 = vunpack.c.l.b16 %v225
      %v808 = vunpack.c.h.b16 %v225
      %v809 = vunpack.c.l.b16 %v226
      %v810 = vunpack.c.h.b16 %v226
      %v811 = vunpack.c.l.b16 %v227
      %v812 = vunpack.c.h.b16 %v227
      %v813 = vunpack.c.l.b16 %v228
      %v814 = vunpack.c.h.b16 %v228
      %v815 = vunpack.c.l.b16 %v229
      %v816 = vunpack.c.h.b16 %v229
      %v817 = vunpack.c.l.b16 %v230
      %v818 = vunpack.c.h.b16 %v230
      %v819 = vunpack.c.l.b16 %v231
      %v820 = vunpack.c.h.b16 %v231
      %v821 = vunpack.c.l.b16 %v232
      %v822 = vunpack.c.h.b16 %v232
      %v823 = vunpack.c.l.b16 %v233
      %v824 = vunpack.c.h.b16 %v233
      %v825 = vunpack.c.l.b16 %v234
      %v826 = vunpack.c.h.b16 %v234
      %v827 = vunpack.c.l.b16 %v235
      %v828 = vunpack.c.h.b16 %v235
      %v829 = vunpack.c.l.b16 %v236
      %v830 = vunpack.c.h.b16 %v236
      %v831 = vunpack.c.l.b16 %v237
      %v832 = vunpack.c.h.b16 %v237
      %v833 = vunpack.c.l.b16 %v238
      %v834 = vunpack.c.h.b16 %v238
      %v835 = vunpack.c.l.b16 %v239
      %v836 = vunpack.c.h.b16 %v239
      %v837 = vunpack.c.l.b16 %v240
      %v838 = vunpack.c.h.b16 %v240
      %v839 = vunpack.c.l.b16 %v241
      %v840 = vunpack.c.h.b16 %v241
      %v841 = vunpack.c.l.b16 %v242
      %v842 = vunpack.c.h.b16 %v242
      %v843 = vunpack.c.l.b16 %v243
      %v844 = vunpack.c.h.b16 %v243
      %v845 = vunpack.c.l.b16 %v244
      %v846 = vunpack.c.h.b16 %v244
      %v847 = vunpack.c.l.b16 %v245
      %v848 = vunpack.c.h.b16 %v245
      %v849 = vunpack.c.l.b16 %v246
      %v850 = vunpack.c.h.b16 %v246
      %v851 = vunpack.c.l.b16 %v247
      %v852 = vunpack.c.h.b16 %v247
      %v853 = vunpack.c.l.b16 %v248
      %v854 = vunpack.c.h.b16 %v248
      %v855 = vunpack.c.l.b16 %v249
      %v856 = vunpack.c.h.b16 %v249
      %v857 = vunpack.c.l.b16 %v250
      %v858 = vunpack.c.h.b16 %v250
      %v859 = vunpack.c.l.b16 %v251
      %v860 = vunpack.c.h.b16 %v251
      %v861 = vunpack.c.l.b16 %v252
      %v862 = vunpack.c.h.b16 %v252
      %v863 = vunpack.c.l.b16 %v253
      %v864 = vunpack.c.h.b16 %v253
      %v865 = vunpack.c.l.b16 %v254
      %v866 = vunpack.c.h.b16 %v254
      %v867 = vunpack.c.l.b16 %v255
      %v868 = vunpack.c.h.b16 %v255
      %v869 = vunpack.c.l.b16 %v256
      %v870 = vunpack.c.h.b16 %v256
      %v871 = vunpack.c.l.b16 %v257
      %v872 = vunpack.c.h.b16 %v257
      %v873 = vunpack.c.l.b16 %v258
      %v874 = vunpack.c.h.b16 %v258
      %v875 = vunpack.c.l.b16 %v259
      %v876 = vunpack.c.h.b16 %v259
      %v877 = vunpack.c.l.b16 %v260
      %v878 = vunpack.c.h.b16 %v260
      %v879 = vunpack.c.l.b16 %v261
      %v880 = vunpack.c.h.b16 %v261
      %v881 = vunpack.c.l.b16 %v262
      %v882 = vunpack.c.h.b16 %v262
      %v883 = vunpack.c.l.b16 %v263
      %v884 = vunpack.c.h.b16 %v263
      %v885 = vunpack.c.l.b16 %v264
      %v886 = vunpack.c.h.b16 %v264
      %v887 = vunpack.c.l.b16 %v265
      %v888 = vunpack.c.h.b16 %v265
      %v889 = vunpack.c.l.b16 %v266
      %v890 = vunpack.c.h.b16 %v266
      %v891 = vunpack.c.l.b16 %v267
      %v892 = vunpack.c.h.b16 %v267
      %v893 = vunpack.c.l.b16 %v268
      %v894 = vunpack.c.h.b16 %v268
      %v895 = vunpack.c.l.b16 %v269
      %v896 = vunpack.c.h.b16 %v269
      %v897 = vunpack.c.l.b16 %v270
      %v898 = vunpack.c.h.b16 %v270
      %v899 = vunpack.c.l.b16 %v271
      %v900 = vunpack.c.h.b16 %v271
      %v901 = vunpack.c.l.b16 %v272
      %v902 = vunpack.c.h.b16 %v272
      %v903 = vunpack.c.l.b16 %v273
      %v904 = vunpack.c.h.b16 %v273
      %v905 = vunpack.c.l.b16 %v274
      %v906 = vunpack.c.h.b16 %v274
      %v907 = vunpack.c.l.b16 %v275
      %v908 = vunpack.c.h.b16 %v275
      %v909 = vunpack.c.l.b16 %v276
      %v910 = vunpack.c.h.b16 %v276
      %v911 = vunpack.c.l.b16 %v277
      %v912 = vunpack.c.h.b16 %v277
      %v913 = vunpack.c.l.b16 %v278
      %v914 = vunpack.c.h.b16 %v278
      %v915 = vunpack.c.l.b16 %v279
      %v916 = vunpack.c.h.b16 %v279
      %v917 = vunpack.c.l.b16 %v280
      %v918 = vunpack.c.h.b16 %v280
      %v919 = vunpack.c.l.b16 %v281
      %v920 = vunpack.c.h.b16 %v281
      %v921 = vunpack.c.l.b16 %v282
      %v922 = vunpack.c.h.b16 %v282
      %v923 = vunpack.c.l.b16 %v283
      %v924 = vunpack.c.h.b16 %v283
      %v925 = vunpack.c.l.b16 %v284
      %v926 = vunpack.c.h.b16 %v284
      %v927 = vunpack.c.l.b16 %v285
      %v928 = vunpack.c.h.b16 %v285
      %v929 = vunpack.c.l.b16 %v286
      %v930 = vunpack.c.h.b16 %v286
      %v931 = vunpack.c.l.b16 %v287
      %v932 = vunpack.c.h.b16 %v287
      %v933 = vunpack.c.l.b16 %v288
      %v934 = vunpack.c.h.b16 %v288
      %v935 = vunpack.c.l.b16 %v289
      %v936 = vunpack.c.h.b16 %v289
      %v937 = vunpack.c.l.b16 %v290
      %v938 = vunpack.c.h.b16 %v290
      %v939 = vunpack.c.l.b16 %v291
      %v940 = vunpack.c.h.b16 %v291
      %v941 = vunpack.c.l.b16 %v292
      %v942 = vunpack.c.h.b16 %v292
      %v943 = vunpack.c.l.b16 %v293
      %v944 = vunpack.c.h.b16 %v293
      %v945 = vunpack.c.l.b16 %v294
      %v946 = vunpack.c.h.b16 %v294
      %v947 = vunpack.c.l.b16 %v295
      %v948 = vunpack.c.h.b16 %v295
      %v949 = vunpack.c.l.b16 %v296
      %v950 = vunpack.c.h.b16 %v296
      %v951 = vunpack.c.l.b16 %v297
      %v952 = vunpack.c.h.b16 %v297
      %v953 = vunpack.c.l.b16 %v298
      %v954 = vunpack.c.h.b16 %v298
      %v955 = vunpack.c.l.b16 %v299
      %v956 = vunpack.c.h.b16 %v299
      %v957 = vunpack.c.l.b16 %v300
      %v958 = vunpack.c.h.b16 %v300
      %v959 = vunpack.c.l.b16 %v301
      %v960 = vunpack.c.h.b16 %v301
      %v961 = vunpack.c.l.b16 %v302
      %v962 = vunpack.c.h.b16 %v302
      %v963 = vunpack.c.l.b16 %v303
      %v964 = vunpack.c.h.b16 %v303
      %v965 = vunpack.c.l.b16 %v304
      %v966 = vunpack.c.h.b16 %v304
      %v967 = vunpack.c.l.b16 %v305
      %v968 = vunpack.c.h.b16 %v305
      %v969 = vunpack.c.l.b16 %v306
      %v970 = vunpack.c.h.b16 %v306
      %v971 = vunpack.c.l.b16 %v307
      %v972 = vunpack.c.h.b16 %v307
      %v973 = vunpack.c.l.b16 %v308
      %v974 = vunpack.c.h.b16 %v308
      %v975 = vunpack.c.l.b16 %v309
      %v976 = vunpack.c.h.b16 %v309
      %v977 = vunpack.c.l.b16 %v310
      %v978 = vunpack.c.h.b16 %v310
      %v979 = vunpack.c.l.b16 %v311
      %v980 = vunpack.c.h.b16 %v311
      %v981 = vunpack.c.l.b16 %v312
      %v982 = vunpack.c.h.b16 %v312
      %v983 = vunpack.c.l.b16 %v313
      %v984 = vunpack.c.h.b16 %v313
      %v985 = vunpack.c.l.b16 %v314
      %v986 = vunpack.c.h.b16 %v314
      %v987 = vunpack.c.l.b16 %v315
      %v988 = vunpack.c.h.b16 %v315
      %v989 = vunpack.c.l.b16 %v316
      %v990 = vunpack.c.h.b16 %v316
      %v991 = vunpack.c.l.b16 %v317
      %v992 = vunpack.c.h.b16 %v317
      %v993 = vunpack.c.l.b16 %v318
      %v994 = vunpack.c.h.b16 %v318
      %v995 = vunpack.c.l.b16 %v319
      %v996 = vunpack.c.h.b16 %v319
      %v997 = vunpack.c.l.b16 %v320
      %v998 = vunpack.c.h.b16 %v320
      %v999 = vunpack.c.l.b16 %v321
      %v1000 = vunpack.c.h.b16 %v321
      %v1001 = vunpack.c.l.b16 %v322
      %v1002 = vunpack.c.h.b16 %v322
      %v1003 = vunpack.c.l.b16 %v323
      %v1004 = vunpack.c.h.b16 %v323
      %v1005 = vunpack.c.l.b16 %v324
      %v1006 = vunpack.c.h.b16 %v324
      %v1007 = vunpack.c.l.b16 %v325
      %v1008 = vunpack.c.h.b16 %v325
      %v1009 = vunpack.c.l.b16 %v326
      %v1010 = vunpack.c.h.b16 %v326
      %v1011 = vunpack.c.l.b16 %v327
      %v1012 = vunpack.c.h.b16 %v327
      %v1013 = vunpack.c.l.b16 %v328
      %v1014 = vunpack.c.h.b16 %v328
      %v1015 = vunpack.c.l.b16 %v329
      %v1016 = vunpack.c.h.b16 %v329
      %v1017 = vunpack.c.l.b16 %v330
      %v1018 = vunpack.c.h.b16 %v330
      %v1019 = vunpack.c.l.b16 %v331
      %v1020 = vunpack.c.h.b16 %v331
      %v1021 = vunpack.c.l.b16 %v332
      %v1022 = vunpack.c.h.b16 %v332
      %v1023 = vunpack.c.l.b16 %v333
      %v1024 = vunpack.c.h.b16 %v333
      %v1025 = vunpack.c.l.b16 %v334
      %v1026 = vunpack.c.h.b16 %v334
      %v1027 = vunpack.c.l.b16 %v335
      %v1028 = vunpack.c.h.b16 %v335
      %v1029 = vunpack.c.l.b16 %v336
      %v1030 = vunpack.c.h.b16 %v336
      %v1031 = vunpack.c.l.b16 %v337
      %v1032 = vunpack.c.h.b16 %v337
      %v1033 = vunpack.c.l.b16 %v338
      %v1034 = vunpack.c.h.b16 %v338
      %v1035 = vunpack.c.l.b16 %v339
      %v1036 = vunpack.c.h.b16 %v339
      %v1037 = vunpack.c.l.b16 %v340
      %v1038 = vunpack.c.h.b16 %v340
      %v1039 = vunpack.c.l.b16 %v341
      %v1040 = vunpack.c.h.b16 %v341
      %v1041 = vunpack.c.l.b16 %v342
      %v1042 = vunpack.c.h.b16 %v342
      %v1043 = vunpack.c.l.b16 %v343
      %v1044 = vunpack.c.h.b16 %v343
      %v1045 = vunpack.c.l.b16 %v344
      %v1046 = vunpack.c.h.b16 %v344
      %v1047 = vunpack.c.l.b16 %v345
      %v1048 = vunpack.c.h.b16 %v345
      %v1049 = vunpack.c.l.b16 %v346
      %v1050 = vunpack.c.h.b16 %v346
      %v1051 = vunpack.c.l.b16 %v347
      %v1052 = vunpack.c.h.b16 %v347
      %v1053 = vunpack.c.l.b16 %v348
      %v1054 = vunpack.c.h.b16 %v348
      %v1055 = vunpack.c.l.b16 %v349
      %v1056 = vunpack.c.h.b16 %v349
      %v1057 = vunpack.c.l.b16 %v350
      %v1058 = vunpack.c.h.b16 %v350
      %v1059 = vunpack.c.l.b16 %v351
      %v1060 = vunpack.c.h.b16 %v351
      %v1061 = vunpack.c.l.b16 %v352
      %v1062 = vunpack.c.h.b16 %v352
      %v1063 = vunpack.c.l.b16 %v353
      %v1064 = vunpack.c.h.b16 %v353
      %v1065 = vunpack.c.l.b16 %v354
      %v1066 = vunpack.c.h.b16 %v354
      %v1067 = vunpack.c.l.b16 %v355
      %v1068 = vunpack.c.h.b16 %v355
      %v1069 = vunpack.c.l.b16 %v356
      %v1070 = vunpack.c.h.b16 %v356
      %v1071 = vunpack.c.l.b16 %v357
      %v1072 = vunpack.c.h.b16 %v357
      %v1073 = vunpack.c.l.b16 %v358
      %v1074 = vunpack.c.h.b16 %v358
      %v1075 = vunpack.c.l.b16 %v359
      %v1076 = vunpack.c.h.b16 %v359
      %v1077 = vunpack.c.l.b16 %v360
      %v1078 = vunpack.c.h.b16 %v360
      %v1079 = vunpack.c.l.b16 %v361
      %v1080 = vunpack.c.h.b16 %v361
      %v1081 = vunpack.c.l.b16 %v362
      %v1082 = vunpack.c.h.b16 %v362
      %v1083 = vunpack.c.l.b16 %v363
      %v1084 = vunpack.c.h.b16 %v363
      %v1085 = vunpack.c.l.b16 %v364
      %v1086 = vunpack.c.h.b16 %v364
      %v1087 = vunpack.c.l.b16 %v365
      %v1088 = vunpack.c.h.b16 %v365
      %v1089 = vunpack.c.l.b16 %v366
      %v1090 = vunpack.c.h.b16 %v366
      %v1091 = vunpack.c.l.b16 %v367
      %v1092 = vunpack.c.h.b16 %v367
      %v1093 = vunpack.c.l.b16 %v368
      %v1094 = vunpack.c.h.b16 %v368
      %v1095 = vunpack.c.l.b16 %v369
      %v1096 = vunpack.c.h.b16 %v369
      %v1097 = vunpack.c.l.b16 %v370
      %v1098 = vunpack.c.h.b16 %v370
      %v1099 = vunpack.c.l.b16 %v371
      %v1100 = vunpack.c.h.b16 %v371
      %v1101 = vunpack.c.l.b16 %v372
      %v1102 = vunpack.c.h.b16 %v372
      %v1103 = vunpack.c.l.b16 %v373
      %v1104 = vunpack.c.h.b16 %v373
      %v1105 = vunpack.c.l.b16 %v374
      %v1106 = vunpack.c.h.b16 %v374
      %v1107 = vunpack.c.l.b16 %v375
      %v1108 = vunpack.c.h.b16 %v375
      %v1109 = vunpack.c.l.b16 %v376
      %v1110 = vunpack.c.h.b16 %v376
      %v1111 = vunpack.c.l.b16 %v377
      %v1112 = vunpack.c.h.b16 %v377
      %v1113 = vunpack.c.l.b16 %v378
      %v1114 = vunpack.c.h.b16 %v378
      %v1115 = vunpack.c.l.b16 %v379
      %v1116 = vunpack.c.h.b16 %v379
      %v1117 = vunpack.c.l.b16 %v380
      %v1118 = vunpack.c.h.b16 %v380
      %v1119 = vunpack.c.l.b16 %v381
      %v1120 = vunpack.c.h.b16 %v381
      %v1121 = vunpack.c.l.b16 %v382
      %v1122 = vunpack.c.h.b16 %v382
      %v1123 = vunpack.c.l.b16 %v383
      %v1124 = vunpack.c.h.b16 %v383
      %v1125 = vunpack.c.l.b16 %v384
      %v1126 = vunpack.c.h.b16 %v384
      %v1127 = vunpack.c.l.b16 %v385
      %v1128 = vunpack.c.h.b16 %v385
      %v1129 = vunpack.c.l.b16 %v386
      %v1130 = vunpack.c.h.b16 %v386
      %v1131 = vunpack.c.l.b16 %v387
      %v1132 = vunpack.c.h.b16 %v387
      %v1133 = vunpack.c.l.b16 %v388
      %v1134 = vunpack.c.h.b16 %v388
      %v1135 = vunpack.c.l.b16 %v389
      %v1136 = vunpack.c.h.b16 %v389
      %v1137 = vunpack.c.l.b16 %v390
      %v1138 = vunpack.c.h.b16 %v390
      %v1139 = vunpack.c.l.b16 %v391
      %v1140 = vunpack.c.h.b16 %v391
      %v1141 = vunpack.c.l.b16 %v392
      %v1142 = vunpack.c.h.b16 %v392
      %v1143 = vunpack.c.l.b16 %v393
      %v1144 = vunpack.c.h.b16 %v393
      %v1145 = vunpack.c.l.b16 %v394
      %v1146 = vunpack.c.h.b16 %v394
      %v1147 = vunpack.c.l.b16 %v395
      %v1148 = vunpack.c.h.b16 %v395
      %v1149 = vunpack.c.l.b16 %v396
      %v1150 = vunpack.c.h.b16 %v396
      %v1151 = vunpack.c.l.b16 %v397
      %v1152 = vunpack.c.h.b16 %v397
      %v1153 = vunpack.c.l.b16 %v398
      %v1154 = vunpack.c.h.b16 %v398
      %v1155 = vunpack.c.l.b16 %v399
      %v1156 = vunpack.c.h.b16 %v399
      %v1157 = vunpack.c.l.b16 %v400
      %v1158 = vunpack.c.h.b16 %v400
      %v1159 = vunpack.c.l.b16 %v401
      %v1160 = vunpack.c.h.b16 %v401
      %v1161 = vunpack.c.l.b16 %v402
      %v1162 = vunpack.c.h.b16 %v402
      %v1163 = vunpack.c.l.b16 %v403
      %v1164 = vunpack.c.h.b16 %v403
      %v1165 = vunpack.c.l.b16 %v404
      %v1166 = vunpack.c.h.b16 %v404
      %v1167 = vunpack.c.l.b16 %v405
      %v1168 = vunpack.c.h.b16 %v405
      %v1169 = vunpack.c.l.b16 %v406
      %v1170 = vunpack.c.h.b16 %v406
      %v1171 = vunpack.c.l.b16 %v407
      %v1172 = vunpack.c.h.b16 %v407
      %v1173 = vunpack.c.l.b16 %v408
      %v1174 = vunpack.c.h.b16 %v408
      %v1175 = vunpack.c.l.b16 %v409
      %v1176 = vunpack.c.h.b16 %v409
      %v1177 = vunpack.c.l.b16 %v410
      %v1178 = vunpack.c.h.b16 %v410
      %v1179 = vunpack.c.l.b16 %v411
      %v1180 = vunpack.c.h.b16 %v411
      %v1181 = vunpack.c.l.b16 %v412
      %v1182 = vunpack.c.h.b16 %v412
      %v1183 = vunpack.c.l.b16 %v413
      %v1184 = vunpack.c.h.b16 %v413
      %v1185 = vunpack.c.l.b16 %v414
      %v1186 = vunpack.c.h.b16 %v414
      %v1187 = vunpack.c.l.b16 %v415
      %v1188 = vunpack.c.h.b16 %v415
      %v1189 = vunpack.c.l.b16 %v416
      %v1190 = vunpack.c.h.b16 %v416
      %v1191 = vunpack.c.l.b16 %v417
      %v1192 = vunpack.c.h.b16 %v417
      %v1193 = vunpack.c.l.b16 %v418
      %v1194 = vunpack.c.h.b16 %v418
      %v1195 = vunpack.c.l.b16 %v419
      %v1196 = vunpack.c.h.b16 %v419
      %v1197 = vunpack.c.l.b16 %v420
      %v1198 = vunpack.c.h.b16 %v420
      %v1199 = vunpack.c.l.b16 %v421
      %v1200 = vunpack.c.h.b16 %v421
      %v1201 = vunpack.c.l.b16 %v422
      %v1202 = vunpack.c.h.b16 %v422
      %v1203 = vunpack.c.l.b16 %v423
      %v1204 = vunpack.c.h.b16 %v423
      %v1205 = vunpack.c.l.b16 %v424
      %v1206 = vunpack.c.h.b16 %v424
      %v1207 = vunpack.c.l.b16 %v425
      %v1208 = vunpack.c.h.b16 %v425
      %v1209 = vunpack.c.l.b16 %v426
      %v1210 = vunpack.c.h.b16 %v426
      %v1211 = vunpack.c.l.b16 %v427
      %v1212 = vunpack.c.h.b16 %v427
      %v1213 = vunpack.c.l.b16 %v428
      %v1214 = vunpack.c.h.b16 %v428
      %v1215 = vunpack.c.l.b16 %v429
      %v1216 = vunpack.c.h.b16 %v429
      %v1217 = vunpack.c.l.b16 %v430
      %v1218 = vunpack.c.h.b16 %v430
      %v1219 = vunpack.c.l.b16 %v431
      %v1220 = vunpack.c.h.b16 %v431
      %v1221 = vunpack.c.l.b16 %v432
      %v1222 = vunpack.c.h.b16 %v432
      %v1223 = vunpack.c.l.b16 %v433
      %v1224 = vunpack.c.h.b16 %v433
      %v1225 = vunpack.c.l.b16 %v434
      %v1226 = vunpack.c.h.b16 %v434
      %v1227 = vunpack.c.l.b16 %v435
      %v1228 = vunpack.c.h.b16 %v435
      %v1229 = vunpack.c.l.b16 %v436
      %v1230 = vunpack.c.h.b16 %v436
      %v1231 = vunpack.c.l.b16 %v437
      %v1232 = vunpack.c.h.b16 %v437
      %v1233 = vunpack.c.l.b16 %v438
      %v1234 = vunpack.c.h.b16 %v438
      %v1235 = vunpack.c.l.b16 %v439
      %v1236 = vunpack.c.h.b16 %v439
      %v1237 = vunpack.c.l.b16 %v440
      %v1238 = vunpack.c.h.b16 %v440
      %v1239 = vunpack.c.l.b16 %v441
      %v1240 = vunpack.c.h.b16 %v441
      %v1241 = vunpack.c.l.b16 %v442
      %v1242 = vunpack.c.h.b16 %v442
      %v1243 = vpack.c.b16 %v739, %v731
      %v1244 = vpack.c.b16 %v740, %v732
      %v1245 = vpack.c.b16 %v741, %v733
      %v1246 = vpack.c.b16 %v742, %v734
      %v1247 = vpack.c.b16 %v743, %v735
      %v1248 = vpack.c.b16 %v744, %v736
      %v1249 = vpack.c.b16 %v745, %v737
      %v1250 = vpack.c.b16 %v746, %v738
      %v1251 = vpack.c.b16 %v755, %v747
      %v1252 = vpack.c.b16 %v756, %v748
      %v1253 = vpack.c.b16 %v757, %v749
      %v1254 = vpack.c.b16 %v758, %v750
      %v1255 = vpack.c.b16 %v759, %v751
      %v1256 = vpack.c.b16 %v760, %v752
      %v1257 = vpack.c.b16 %v761, %v753
      %v1258 = vpack.c.b16 %v762, %v754
      %v1259 = vpack.c.b16 %v771, %v763
      %v1260 = vpack.c.b16 %v772, %v764
      %v1261 = vpack.c.b16 %v773, %v765
      %v1262 = vpack.c.b16 %v774, %v766
      %v1263 = vpack.c.b16 %v775, %v767
      %v1264 = vpack.c.b16 %v776, %v768
      %v1265 = vpack.c.b16 %v777, %v769
      %v1266 = vpack.c.b16 %v778, %v770
      %v1267 = vpack.c.b16 %v787, %v779
      %v1268 = vpack.c.b16 %v788, %v780
      %v1269 = vpack.c.b16 %v789, %v781
      %v1270 = vpack.c.b16 %v790, %v782
      %v1271 = vpack.c.b16 %v791, %v783
      %v1272 = vpack.c.b16 %v792, %v784
      %v1273 = vpack.c.b16 %v793, %v785
      %v1274 = vpack.c.b16 %v794, %v786
      %v1275 = vpack.c.b16 %v803, %v795
      %v1276 = vpack.c.b16 %v804, %v796
      %v1277 = vpack.c.b16 %v805, %v797
      %v1278 = vpack.c.b16 %v806, %v798
      %v1279 = vpack.c.b16 %v807, %v799
      %v1280 = vpack.c.b16 %v808, %v800
      %v1281 = vpack.c.b16 %v809, %v801
      %v1282 = vpack.c.b16 %v810, %v802
      %v1283 = vpack.c.b16 %v819, %v811
      %v1284 = vpack.c.b16 %v820, %v812
      %v1285 = vpack.c.b16 %v821, %v813
      %v1286 = vpack.c.b16 %v822, %v814
      %v1287 = vpack.c.b16 %v823, %v815
      %v1288 = vpack.c.b16 %v824, %v816
      %v1289 = vpack.c.b16 %v825, %v817
      %v1290 = vpack.c.b16 %v826, %v818
      %v1291 = vpack.c.b16 %v835, %v827
      %v1292 = vpack.c.b16 %v836, %v828
      %v1293 = vpack.c.b16 %v837, %v829
      %v1294 = vpack.c.b16 %v838, %v830
      %v1295 = vpack.c.b16 %v839, %v831
      %v1296 = vpack.c.b16 %v840, %v832
      %v1297 = vpack.c.b16 %v841, %v833
      %v1298 = vpack.c.b16 %v842, %v834
      %v1299 = vpack.c.b16 %v851, %v843
      %v1300 = vpack.c.b16 %v852, %v844
      %v1301 = vpack.c.b16 %v853, %v845
      %v1302 = vpack.c.b16 %v854, %v846
      %v1303 = vpack.c.b16 %v855, %v847
      %v1304 = vpack.c.b16 %v856, %v848
      %v1305 = vpack.c.b16 %v857, %v849
      %v1306 = vpack.c.b16 %v858, %v850
      %v1307 = vpack.c.b16 %v867, %v859
      %v1308 = vpack.c.b16 %v868, %v860
      %v1309 = vpack.c.b16 %v869, %v861
      %v1310 = vpack.c.b16 %v870, %v862
      %v1311 = vpack.c.b16 %v871, %v863
      %v1312 = vpack.c.b16 %v872, %v864
      %v1313 = vpack.c.b16 %v873, %v865
      %v1314 = vpack.c.b16 %v874, %v866
      %v1315 = vpack.c.b16 %v883, %v875
      %v1316 = vpack.c.b16 %v884, %v876
      %v1317 = vpack.c.b16 %v885, %v877
      %v1318 = vpack.c.b16 %v886, %v878
      %v1319 = vpack.c.b16 %v887, %v879
      %v1320 = vpack.c.b16 %v888, %v880
      %v1321 = vpack.c.b16 %v889, %v881
      %v1322 = vpack.c.b16 %v890, %v882
      %v1323 = vpack.c.b16 %v899, %v891
      %v1324 = vpack.c.b16 %v900, %v892
      %v1325 = vpack.c.b16 %v901, %v893
      %v1326 = vpack.c.b16 %v902, %v894
      %v1327 = vpack.c.b16 %v903, %v895
      %v1328 = vpack.c.b16 %v904, %v896
      %v1329 = vpack.c.b16 %v905, %v897
      %v1330 = vpack.c.b16 %v906, %v898
      %v1331 = vpack.c.b16 %v915, %v907
      %v1332 = vpack.c.b16 %v916, %v908
      %v1333 = vpack.c.b16 %v917, %v909
      %v1334 = vpack.c.b16 %v918, %v910
      %v1335 = vpack.c.b16 %v919, %v911
      %v1336 = vpack.c.b16 %v920, %v912
      %v1337 = vpack.c.b16 %v921, %v913
      %v1338 = vpack.c.b16 %v922, %v914
      %v1339 = vpack.c.b16 %v931, %v923
      %v1340 = vpack.c.b16 %v932, %v924
      %v1341 = vpack.c.b16 %v933, %v925
      %v1342 = vpack.c.b16 %v934, %v926
      %v1343 = vpack.c.b16 %v935, %v927
      %v1344 = vpack.c.b16 %v936, %v928
      %v1345 = vpack.c.b16 %v937, %v929
      %v1346 = vpack.c.b16 %v938, %v930
      %v1347 = vpack.c.b16 %v947, %v939
      %v1348 = vpack.c.b16 %v948, %v940
      %v1349 = vpack.c.b16 %v949, %v941
      %v1350 = vpack.c.b16 %v950, %v942
      %v1351 = vpack.c.b16 %v951, %v943
      %v1352 = vpack.c.b16 %v952, %v944
      %v1353 = vpack.c.b16 %v953, %v945
      %v1354 = vpack.c.b16 %v954, %v946
      %v1355 = vpack.c.b16 %v963, %v955
      %v1356 = vpack.c.b16 %v964, %v956
      %v1357 = vpack.c.b16 %v965, %v957
      %v1358 = vpack.c.b16 %v966, %v958
      %v1359 = vpack.c.b16 %v967, %v959
      %v1360 = vpack.c.b16 %v968, %v960
      %v1361 = vpack.c.b16 %v969, %v961
      %v1362 = vpack.c.b16 %v970, %v962
      %v1363 = vpack.c.b16 %v979, %v971
      %v1364 = vpack.c.b16 %v980, %v972
      %v1365 = vpack.c.b16 %v981, %v973
      %v1366 = vpack.c.b16 %v982, %v974
      %v1367 = vpack.c.b16 %v983, %v975
      %v1368 = vpack.c.b16 %v984, %v976
      %v1369 = vpack.c.b16 %v985, %v977
      %v1370 = vpack.c.b16 %v986, %v978
      %v1371 = vpack.c.b16 %v995, %v987
      %v1372 = vpack.c.b16 %v996, %v988
      %v1373 = vpack.c.b16 %v997, %v989
      %v1374 = vpack.c.b16 %v998, %v990
      %v1375 = vpack.c.b16 %v999, %v991
      %v1376 = vpack.c.b16 %v1000, %v992
      %v1377 = vpack.c.b16 %v1001, %v993
      %v1378 = vpack.c.b16 %v1002, %v994
      %v1379 = vpack.c.b16 %v1011, %v1003
      %v1380 = vpack.c.b16 %v1012, %v1004
      %v1381 = vpack.c.b16 %v1013, %v1005
      %v1382 = vpack.c.b16 %v1014, %v1006
      %v1383 = vpack.c.b16 %v1015, %v1007
      %v1384 = vpack.c.b16 %v1016, %v1008
      %v1385 = vpack.c.b16 %v1017, %v1009
      %v1386 = vpack.c.b16 %v1018, %v1010
      %v1387 = vpack.c.b16 %v1027, %v1019
      %v1388 = vpack.c.b16 %v1028, %v1020
      %v1389 = vpack.c.b16 %v1029, %v1021
      %v1390 = vpack.c.b16 %v1030, %v1022
      %v1391 = vpack.c.b16 %v1031, %v1023
      %v1392 = vpack.c.b16 %v1032, %v1024
      %v1393 = vpack.c.b16 %v1033, %v1025
      %v1394 = vpack.c.b16 %v1034, %v1026
      %v1395 = vpack.c.b16 %v1043, %v1035
      %v1396 = vpack.c.b16 %v1044, %v1036
      %v1397 = vpack.c.b16 %v1045, %v1037
      %v1398 = vpack.c.b16 %v1046, %v1038
      %v1399 = vpack.c.b16 %v1047, %v1039
      %v1400 = vpack.c.b16 %v1048, %v1040
      %v1401 = vpack.c.b16 %v1049, %v1041
      %v1402 = vpack.c.b16 %v1050, %v1042
      %v1403 = vpack.c.b16 %v1059, %v1051
      %v1404 = vpack.c.b16 %v1060, %v1052
      %v1405 = vpack.c.b16 %v1061, %v1053
      %v1406 = vpack.c.b16 %v1062, %v1054
      %v1407 = vpack.c.b16 %v1063, %v1055
      %v1408 = vpack.c.b16 %v1064, %v1056
      %v1409 = vpack.c.b16 %v1065, %v1057
      %v1410 = vpack.c.b16 %v1066, %v1058
      %v1411 = vpack.c.b16 %v1075, %v1067
      %v1412 = vpack.c.b16 %v1076, %v1068
      %v1413 = vpack.c.b16 %v1077, %v1069
      %v1414 = vpack.c.b16 %v1078, %v1070
      %v1415 = vpack.c.b16 %v1079, %v1071
      %v1416 = vpack.c.b16 %v1080, %v1072
      %v1417 = vpack.c.b16 %v1081, %v1073
      %v1418 = vpack.c.b16 %v1082, %v1074
      %v1419 = vpack.c.b16 %v1091, %v1083
      %v1420 = vpack.c.b16 %v1092, %v1084
      %v1421 = vpack.c.b16 %v1093, %v1085
      %v1422 = vpack.c.b16 %v1094, %v1086
      %v1423 = vpack.c.b16 %v1095, %v1087
      %v1424 = vpack.c.b16 %v1096, %v1088
      %v1425 = vpack.c.b16 %v1097, %v1089
      %v1426 = vpack.c.b16 %v1098, %v1090
      %v1427 = vpack.c.b16 %v1107, %v1099
      %v1428 = vpack.c.b16 %v1108, %v1100
      %v1429 = vpack.c.b16 %v1109, %v1101
      %v1430 = vpack.c.b16 %v1110, %v1102
      %v1431 = vpack.c.b16 %v1111, %v1103
      %v1432 = vpack.c.b16 %v1112, %v1104
      %v1433 = vpack.c.b16 %v1113, %v1105
      %v1434 = vpack.c.b16 %v1114, %v1106
      %v1435 = vpack.c.b16 %v1123, %v1115
      %v1436 = vpack.c.b16 %v1124, %v1116
      %v1437 = vpack.c.b16 %v1125, %v1117
      %v1438 = vpack.c.b16 %v1126, %v1118
      %v1439 = vpack.c.b16 %v1127, %v1119
      %v1440 = vpack.c.b16 %v1128, %v1120
      %v1441 = vpack.c.b16 %v1129, %v1121
      %v1442 = vpack.c.b16 %v1130, %v1122
      %v1443 = vpack.c.b16 %v1139, %v1131
      %v1444 = vpack.c.b16 %v1140, %v1132
      %v1445 = vpack.c.b16 %v1141, %v1133
      %v1446 = vpack.c.b16 %v1142, %v1134
      %v1447 = vpack.c.b16 %v1143, %v1135
      %v1448 = vpack.c.b16 %v1144, %v1136
      %v1449 = vpack.c.b16 %v1145, %v1137
      %v1450 = vpack.c.b16 %v1146, %v1138
      %v1451 = vpack.c.b16 %v1155, %v1147
      %v1452 = vpack.c.b16 %v1156, %v1148
      %v1453 = vpack.c.b16 %v1157, %v1149
      %v1454 = vpack.c.b16 %v1158, %v1150
      %v1455 = vpack.c.b16 %v1159, %v1151
      %v1456 = vpack.c.b16 %v1160, %v1152
      %v1457 = vpack.c.b16 %v1161, %v1153
      %v1458 = vpack.c.b16 %v1162, %v1154
      %v1459 = vpack.c.b16 %v1171, %v1163
      %v1460 = vpack.c.b16 %v1172, %v1164
      %v1461 = vpack.c.b16 %v1173, %v1165
      %v1462 = vpack.c.b16 %v1174, %v1166
      %v1463 = vpack.c.b16 %v1175, %v1167
      %v1464 = vpack.c.b16 %v1176, %v1168
      %v1465 = vpack.c.b16 %v1177, %v1169
      %v1466 = vpack.c.b16 %v1178, %v1170
      %v1467 = vpack.c.b16 %v1187, %v1179
      %v1468 = vpack.c.b16 %v1188, %v1180
      %v1469 = vpack.c.b16 %v1189, %v1181
      %v1470 = vpack.c.b16 %v1190, %v1182
      %v1471 = vpack.c.b16 %v1191, %v1183
      %v1472 = vpack.c.b16 %v1192, %v1184
      %v1473 = vpack.c.b16 %v1193, %v1185
      %v1474 = vpack.c.b16 %v1194, %v1186
      %v1475 = vpack.c.b16 %v1203, %v1195
      %v1476 = vpack.c.b16 %v1204, %v1196
      %v1477 = vpack.c.b16 %v1205, %v1197
      %v1478 = vpack.c.b16 %v1206, %v1198
      %v1479 = vpack.c.b16 %v1207, %v1199
      %v1480 = vpack.c.b16 %v1208, %v1200
      %v1481 = vpack.c.b16 %v1209, %v1201
      %v1482 = vpack.c.b16 %v1210, %v1202
      %v1483 = vpack.c.b16 %v1219, %v1211
      %v1484 = vpack.c.b16 %v1220, %v1212
      %v1485 = vpack.c.b16 %v1221, %v1213
      %v1486 = vpack.c.b16 %v1222, %v1214
      %v1487 = vpack.c.b16 %v1223, %v1215
      %v1488 = vpack.c.b16 %v1224, %v1216
      %v1489 = vpack.c.b16 %v1225, %v1217
      %v1490 = vpack.c.b16 %v1226, %v1218
      %v1491 = vpack.c.b16 %v1235, %v1227
      %v1492 = vpack.c.b16 %v1236, %v1228
      %v1493 = vpack.c.b16 %v1237, %v1229
      %v1494 = vpack.c.b16 %v1238, %v1230
      %v1495 = vpack.c.b16 %v1239, %v1231
      %v1496 = vpack.c.b16 %v1240, %v1232
      %v1497 = vpack.c.b16 %v1241, %v1233
      %v1498 = vpack.c.b16 %v1242, %v1234
      %1755 = vmatpush.bf16.msra.mxu0 %v1299
      %1756 = vmatpush.bf16.msra.mxu0 %v1291
      %1757 = vmatpush.bf16.msra.mxu0 %v1283
      %1758 = vmatpush.bf16.msra.mxu0 %v1275
      %1759 = vmatpush.bf16.msra.mxu0 %v1267
      %1760 = vmatpush.bf16.msra.mxu0 %v1259
      %1761 = vmatpush.bf16.msra.mxu0 %v1251
      %1762 = vmatpush.bf16.msra.mxu0 %v1243
      %1763 = vmatmul.bf16.gmra.mxu0 %v467
      %v1764 = vpop.f32.mrf.mxu0
      %v1765 = vadd.f32 %v445, %v1764
      %v1766 = vpop.f32.mrf.mxu0
      %1767 = vdwg.mxu0
      %1768 = vmatpush.bf16.msra.mxu0 %v1363
      %1769 = vmatpush.bf16.msra.mxu0 %v1355
      %1770 = vmatpush.bf16.msra.mxu0 %v1347
      %1771 = vmatpush.bf16.msra.mxu0 %v1339
      %1772 = vmatpush.bf16.msra.mxu0 %v1331
      %1773 = vmatpush.bf16.msra.mxu0 %v1323
      %1774 = vmatpush.bf16.msra.mxu0 %v1315
      %1775 = vmatpush.bf16.msra.mxu0 %v1307
      %1776 = vmatmul.bf16.gmra.mxu0 %v468
      %v1777 = vpop.f32.mrf.mxu0
      %v1778 = vadd.f32 %v1765, %v1777
      %v1779 = vpop.f32.mrf.mxu0
      %1780 = vdwg.mxu0
      %1781 = vmatpush.bf16.msra.mxu0 %v1427
      %1782 = vmatpush.bf16.msra.mxu0 %v1419
      %1783 = vmatpush.bf16.msra.mxu0 %v1411
      %1784 = vmatpush.bf16.msra.mxu0 %v1403
      %1785 = vmatpush.bf16.msra.mxu0 %v1395
      %1786 = vmatpush.bf16.msra.mxu0 %v1387
      %1787 = vmatpush.bf16.msra.mxu0 %v1379
      %1788 = vmatpush.bf16.msra.mxu0 %v1371
      %1789 = vmatmul.bf16.gmra.mxu0 %v469
      %v1790 = vpop.f32.mrf.mxu0
      %v1791 = vadd.f32 %v1778, %v1790
      %v1792 = vpop.f32.mrf.mxu0
      %1793 = vdwg.mxu0
      %1794 = vmatpush.bf16.msra.mxu0 %v1491
      %1795 = vmatpush.bf16.msra.mxu0 %v1483
      %1796 = vmatpush.bf16.msra.mxu0 %v1475
      %1797 = vmatpush.bf16.msra.mxu0 %v1467
      %1798 = vmatpush.bf16.msra.mxu0 %v1459
      %1799 = vmatpush.bf16.msra.mxu0 %v1451
      %1800 = vmatpush.bf16.msra.mxu0 %v1443
      %1801 = vmatpush.bf16.msra.mxu0 %v1435
      %1802 = vmatmul.bf16.gmra.mxu0 %v470
      %v1803 = vpop.f32.mrf.mxu0
      %v1804 = vadd.f32 %v1791, %v1803
      %v1805 = vpop.f32.mrf.mxu0
      %1806 = vdwg.mxu0
      %1807 = vmatpush.bf16.msra.mxu0 %v1300
      %1808 = vmatpush.bf16.msra.mxu0 %v1292
      %1809 = vmatpush.bf16.msra.mxu0 %v1284
      %1810 = vmatpush.bf16.msra.mxu0 %v1276
      %1811 = vmatpush.bf16.msra.mxu0 %v1268
      %1812 = vmatpush.bf16.msra.mxu0 %v1260
      %1813 = vmatpush.bf16.msra.mxu0 %v1252
      %1814 = vmatpush.bf16.msra.mxu0 %v1244
      %1815 = vmatmul.bf16.gmra.mxu0 %v467
      %v1816 = vpop.f32.mrf.mxu0
      %v1817 = vadd.f32 %v446, %v1816
      %v1818 = vpop.f32.mrf.mxu0
      %1819 = vdwg.mxu0
      %1820 = vmatpush.bf16.msra.mxu0 %v1364
      %1821 = vmatpush.bf16.msra.mxu0 %v1356
      %1822 = vmatpush.bf16.msra.mxu0 %v1348
      %1823 = vmatpush.bf16.msra.mxu0 %v1340
      %1824 = vmatpush.bf16.msra.mxu0 %v1332
      %1825 = vmatpush.bf16.msra.mxu0 %v1324
      %1826 = vmatpush.bf16.msra.mxu0 %v1316
      %1827 = vmatpush.bf16.msra.mxu0 %v1308
      %1828 = vmatmul.bf16.gmra.mxu0 %v468
      %v1829 = vpop.f32.mrf.mxu0
      %v1830 = vadd.f32 %v1817, %v1829
      %v1831 = vpop.f32.mrf.mxu0
      %1832 = vdwg.mxu0
      %1833 = vmatpush.bf16.msra.mxu0 %v1428
      %1834 = vmatpush.bf16.msra.mxu0 %v1420
      %1835 = vmatpush.bf16.msra.mxu0 %v1412
      %1836 = vmatpush.bf16.msra.mxu0 %v1404
      %1837 = vmatpush.bf16.msra.mxu0 %v1396
      %1838 = vmatpush.bf16.msra.mxu0 %v1388
      %1839 = vmatpush.bf16.msra.mxu0 %v1380
      %1840 = vmatpush.bf16.msra.mxu0 %v1372
      %1841 = vmatmul.bf16.gmra.mxu0 %v469
      %v1842 = vpop.f32.mrf.mxu0
      %v1843 = vadd.f32 %v1830, %v1842
      %v1844 = vpop.f32.mrf.mxu0
      %1845 = vdwg.mxu0
      %1846 = vmatpush.bf16.msra.mxu0 %v1492
      %1847 = vmatpush.bf16.msra.mxu0 %v1484
      %1848 = vmatpush.bf16.msra.mxu0 %v1476
      %1849 = vmatpush.bf16.msra.mxu0 %v1468
      %1850 = vmatpush.bf16.msra.mxu0 %v1460
      %1851 = vmatpush.bf16.msra.mxu0 %v1452
      %1852 = vmatpush.bf16.msra.mxu0 %v1444
      %1853 = vmatpush.bf16.msra.mxu0 %v1436
      %1854 = vmatmul.bf16.gmra.mxu0 %v470
      %v1855 = vpop.f32.mrf.mxu0
      %v1856 = vadd.f32 %v1843, %v1855
      %v1857 = vpop.f32.mrf.mxu0
      %1858 = vdwg.mxu0
      %1859 = vmatpush.bf16.msra.mxu0 %v1301
      %1860 = vmatpush.bf16.msra.mxu0 %v1293
      %1861 = vmatpush.bf16.msra.mxu0 %v1285
      %1862 = vmatpush.bf16.msra.mxu0 %v1277
      %1863 = vmatpush.bf16.msra.mxu0 %v1269
      %1864 = vmatpush.bf16.msra.mxu0 %v1261
      %1865 = vmatpush.bf16.msra.mxu0 %v1253
      %1866 = vmatpush.bf16.msra.mxu0 %v1245
      %1867 = vmatmul.bf16.gmra.mxu0 %v467
      %v1868 = vpop.f32.mrf.mxu0
      %v1869 = vadd.f32 %v447, %v1868
      %v1870 = vpop.f32.mrf.mxu0
      %1871 = vdwg.mxu0
      %1872 = vmatpush.bf16.msra.mxu0 %v1365
      %1873 = vmatpush.bf16.msra.mxu0 %v1357
      %1874 = vmatpush.bf16.msra.mxu0 %v1349
      %1875 = vmatpush.bf16.msra.mxu0 %v1341
      %1876 = vmatpush.bf16.msra.mxu0 %v1333
      %1877 = vmatpush.bf16.msra.mxu0 %v1325
      %1878 = vmatpush.bf16.msra.mxu0 %v1317
      %1879 = vmatpush.bf16.msra.mxu0 %v1309
      %1880 = vmatmul.bf16.gmra.mxu0 %v468
      %v1881 = vpop.f32.mrf.mxu0
      %v1882 = vadd.f32 %v1869, %v1881
      %v1883 = vpop.f32.mrf.mxu0
      %1884 = vdwg.mxu0
      %1885 = vmatpush.bf16.msra.mxu0 %v1429
      %1886 = vmatpush.bf16.msra.mxu0 %v1421
      %1887 = vmatpush.bf16.msra.mxu0 %v1413
      %1888 = vmatpush.bf16.msra.mxu0 %v1405
      %1889 = vmatpush.bf16.msra.mxu0 %v1397
      %1890 = vmatpush.bf16.msra.mxu0 %v1389
      %1891 = vmatpush.bf16.msra.mxu0 %v1381
      %1892 = vmatpush.bf16.msra.mxu0 %v1373
      %1893 = vmatmul.bf16.gmra.mxu0 %v469
      %v1894 = vpop.f32.mrf.mxu0
      %v1895 = vadd.f32 %v1882, %v1894
      %v1896 = vpop.f32.mrf.mxu0
      %1897 = vdwg.mxu0
      %1898 = vmatpush.bf16.msra.mxu0 %v1493
      %1899 = vmatpush.bf16.msra.mxu0 %v1485
      %1900 = vmatpush.bf16.msra.mxu0 %v1477
      %1901 = vmatpush.bf16.msra.mxu0 %v1469
      %1902 = vmatpush.bf16.msra.mxu0 %v1461
      %1903 = vmatpush.bf16.msra.mxu0 %v1453
      %1904 = vmatpush.bf16.msra.mxu0 %v1445
      %1905 = vmatpush.bf16.msra.mxu0 %v1437
      %1906 = vmatmul.bf16.gmra.mxu0 %v470
      %v1907 = vpop.f32.mrf.mxu0
      %v1908 = vadd.f32 %v1895, %v1907
      %v1909 = vpop.f32.mrf.mxu0
      %1910 = vdwg.mxu0
      %1911 = vmatpush.bf16.msra.mxu0 %v1302
      %1912 = vmatpush.bf16.msra.mxu0 %v1294
      %1913 = vmatpush.bf16.msra.mxu0 %v1286
      %1914 = vmatpush.bf16.msra.mxu0 %v1278
      %1915 = vmatpush.bf16.msra.mxu0 %v1270
      %1916 = vmatpush.bf16.msra.mxu0 %v1262
      %1917 = vmatpush.bf16.msra.mxu0 %v1254
      %1918 = vmatpush.bf16.msra.mxu0 %v1246
      %1919 = vmatmul.bf16.gmra.mxu0 %v467
      %v1920 = vpop.f32.mrf.mxu0
      %v1921 = vadd.f32 %v448, %v1920
      %v1922 = vpop.f32.mrf.mxu0
      %1923 = vdwg.mxu0
      %1924 = vmatpush.bf16.msra.mxu0 %v1366
      %1925 = vmatpush.bf16.msra.mxu0 %v1358
      %1926 = vmatpush.bf16.msra.mxu0 %v1350
      %1927 = vmatpush.bf16.msra.mxu0 %v1342
      %1928 = vmatpush.bf16.msra.mxu0 %v1334
      %1929 = vmatpush.bf16.msra.mxu0 %v1326
      %1930 = vmatpush.bf16.msra.mxu0 %v1318
      %1931 = vmatpush.bf16.msra.mxu0 %v1310
      %1932 = vmatmul.bf16.gmra.mxu0 %v468
      %v1933 = vpop.f32.mrf.mxu0
      %v1934 = vadd.f32 %v1921, %v1933
      %v1935 = vpop.f32.mrf.mxu0
      %1936 = vdwg.mxu0
      %1937 = vmatpush.bf16.msra.mxu0 %v1430
      %1938 = vmatpush.bf16.msra.mxu0 %v1422
      %1939 = vmatpush.bf16.msra.mxu0 %v1414
      %1940 = vmatpush.bf16.msra.mxu0 %v1406
      %1941 = vmatpush.bf16.msra.mxu0 %v1398
      %1942 = vmatpush.bf16.msra.mxu0 %v1390
      %1943 = vmatpush.bf16.msra.mxu0 %v1382
      %1944 = vmatpush.bf16.msra.mxu0 %v1374
      %1945 = vmatmul.bf16.gmra.mxu0 %v469
      %v1946 = vpop.f32.mrf.mxu0
      %v1947 = vadd.f32 %v1934, %v1946
      %v1948 = vpop.f32.mrf.mxu0
      %1949 = vdwg.mxu0
      %1950 = vmatpush.bf16.msra.mxu0 %v1494
      %1951 = vmatpush.bf16.msra.mxu0 %v1486
      %1952 = vmatpush.bf16.msra.mxu0 %v1478
      %1953 = vmatpush.bf16.msra.mxu0 %v1470
      %1954 = vmatpush.bf16.msra.mxu0 %v1462
      %1955 = vmatpush.bf16.msra.mxu0 %v1454
      %1956 = vmatpush.bf16.msra.mxu0 %v1446
      %1957 = vmatpush.bf16.msra.mxu0 %v1438
      %1958 = vmatmul.bf16.gmra.mxu0 %v470
      %v1959 = vpop.f32.mrf.mxu0
      %v1960 = vadd.f32 %v1947, %v1959
      %v1961 = vpop.f32.mrf.mxu0
      %1962 = vdwg.mxu0
      %1963 = vmatpush.bf16.msra.mxu0 %v1303
      %1964 = vmatpush.bf16.msra.mxu0 %v1295
      %1965 = vmatpush.bf16.msra.mxu0 %v1287
      %1966 = vmatpush.bf16.msra.mxu0 %v1279
      %1967 = vmatpush.bf16.msra.mxu0 %v1271
      %1968 = vmatpush.bf16.msra.mxu0 %v1263
      %1969 = vmatpush.bf16.msra.mxu0 %v1255
      %1970 = vmatpush.bf16.msra.mxu0 %v1247
      %1971 = vmatmul.bf16.gmra.mxu0 %v467
      %v1972 = vpop.f32.mrf.mxu0
      %v1973 = vadd.f32 %v449, %v1972
      %v1974 = vpop.f32.mrf.mxu0
      %1975 = vdwg.mxu0
      %1976 = vmatpush.bf16.msra.mxu0 %v1367
      %1977 = vmatpush.bf16.msra.mxu0 %v1359
      %1978 = vmatpush.bf16.msra.mxu0 %v1351
      %1979 = vmatpush.bf16.msra.mxu0 %v1343
      %1980 = vmatpush.bf16.msra.mxu0 %v1335
      %1981 = vmatpush.bf16.msra.mxu0 %v1327
      %1982 = vmatpush.bf16.msra.mxu0 %v1319
      %1983 = vmatpush.bf16.msra.mxu0 %v1311
      %1984 = vmatmul.bf16.gmra.mxu0 %v468
      %v1985 = vpop.f32.mrf.mxu0
      %v1986 = vadd.f32 %v1973, %v1985
      %v1987 = vpop.f32.mrf.mxu0
      %1988 = vdwg.mxu0
      %1989 = vmatpush.bf16.msra.mxu0 %v1431
      %1990 = vmatpush.bf16.msra.mxu0 %v1423
      %1991 = vmatpush.bf16.msra.mxu0 %v1415
      %1992 = vmatpush.bf16.msra.mxu0 %v1407
      %1993 = vmatpush.bf16.msra.mxu0 %v1399
      %1994 = vmatpush.bf16.msra.mxu0 %v1391
      %1995 = vmatpush.bf16.msra.mxu0 %v1383
      %1996 = vmatpush.bf16.msra.mxu0 %v1375
      %1997 = vmatmul.bf16.gmra.mxu0 %v469
      %v1998 = vpop.f32.mrf.mxu0
      %v1999 = vadd.f32 %v1986, %v1998
      %v2000 = vpop.f32.mrf.mxu0
      %2001 = vdwg.mxu0
      %2002 = vmatpush.bf16.msra.mxu0 %v1495
      %2003 = vmatpush.bf16.msra.mxu0 %v1487
      %2004 = vmatpush.bf16.msra.mxu0 %v1479
      %2005 = vmatpush.bf16.msra.mxu0 %v1471
      %2006 = vmatpush.bf16.msra.mxu0 %v1463
      %2007 = vmatpush.bf16.msra.mxu0 %v1455
      %2008 = vmatpush.bf16.msra.mxu0 %v1447
      %2009 = vmatpush.bf16.msra.mxu0 %v1439
      %2010 = vmatmul.bf16.gmra.mxu0 %v470
      %v2011 = vpop.f32.mrf.mxu0
      %v2012 = vadd.f32 %v1999, %v2011
      %v2013 = vpop.f32.mrf.mxu0
      %2014 = vdwg.mxu0
      %2015 = vmatpush.bf16.msra.mxu0 %v1304
      %2016 = vmatpush.bf16.msra.mxu0 %v1296
      %2017 = vmatpush.bf16.msra.mxu0 %v1288
      %2018 = vmatpush.bf16.msra.mxu0 %v1280
      %2019 = vmatpush.bf16.msra.mxu0 %v1272
      %2020 = vmatpush.bf16.msra.mxu0 %v1264
      %2021 = vmatpush.bf16.msra.mxu0 %v1256
      %2022 = vmatpush.bf16.msra.mxu0 %v1248
      %2023 = vmatmul.bf16.gmra.mxu0 %v467
      %v2024 = vpop.f32.mrf.mxu0
      %v2025 = vadd.f32 %v450, %v2024
      %v2026 = vpop.f32.mrf.mxu0
      %2027 = vdwg.mxu0
      %2028 = vmatpush.bf16.msra.mxu0 %v1368
      %2029 = vmatpush.bf16.msra.mxu0 %v1360
      %2030 = vmatpush.bf16.msra.mxu0 %v1352
      %2031 = vmatpush.bf16.msra.mxu0 %v1344
      %2032 = vmatpush.bf16.msra.mxu0 %v1336
      %2033 = vmatpush.bf16.msra.mxu0 %v1328
      %2034 = vmatpush.bf16.msra.mxu0 %v1320
      %2035 = vmatpush.bf16.msra.mxu0 %v1312
      %2036 = vmatmul.bf16.gmra.mxu0 %v468
      %v2037 = vpop.f32.mrf.mxu0
      %v2038 = vadd.f32 %v2025, %v2037
      %v2039 = vpop.f32.mrf.mxu0
      %2040 = vdwg.mxu0
      %2041 = vmatpush.bf16.msra.mxu0 %v1432
      %2042 = vmatpush.bf16.msra.mxu0 %v1424
      %2043 = vmatpush.bf16.msra.mxu0 %v1416
      %2044 = vmatpush.bf16.msra.mxu0 %v1408
      %2045 = vmatpush.bf16.msra.mxu0 %v1400
      %2046 = vmatpush.bf16.msra.mxu0 %v1392
      %2047 = vmatpush.bf16.msra.mxu0 %v1384
      %2048 = vmatpush.bf16.msra.mxu0 %v1376
      %2049 = vmatmul.bf16.gmra.mxu0 %v469
      %v2050 = vpop.f32.mrf.mxu0
      %v2051 = vadd.f32 %v2038, %v2050
      %v2052 = vpop.f32.mrf.mxu0
      %2053 = vdwg.mxu0
      %2054 = vmatpush.bf16.msra.mxu0 %v1496
      %2055 = vmatpush.bf16.msra.mxu0 %v1488
      %2056 = vmatpush.bf16.msra.mxu0 %v1480
      %2057 = vmatpush.bf16.msra.mxu0 %v1472
      %2058 = vmatpush.bf16.msra.mxu0 %v1464
      %2059 = vmatpush.bf16.msra.mxu0 %v1456
      %2060 = vmatpush.bf16.msra.mxu0 %v1448
      %2061 = vmatpush.bf16.msra.mxu0 %v1440
      %2062 = vmatmul.bf16.gmra.mxu0 %v470
      %v2063 = vpop.f32.mrf.mxu0
      %v2064 = vadd.f32 %v2051, %v2063
      %v2065 = vpop.f32.mrf.mxu0
      %2066 = vdwg.mxu0
      %2067 = vmatpush.bf16.msra.mxu0 %v1305
      %2068 = vmatpush.bf16.msra.mxu0 %v1297
      %2069 = vmatpush.bf16.msra.mxu0 %v1289
      %2070 = vmatpush.bf16.msra.mxu0 %v1281
      %2071 = vmatpush.bf16.msra.mxu0 %v1273
      %2072 = vmatpush.bf16.msra.mxu0 %v1265
      %2073 = vmatpush.bf16.msra.mxu0 %v1257
      %2074 = vmatpush.bf16.msra.mxu0 %v1249
      %2075 = vmatmul.bf16.gmra.mxu0 %v467
      %v2076 = vpop.f32.mrf.mxu0
      %v2077 = vadd.f32 %v451, %v2076
      %v2078 = vpop.f32.mrf.mxu0
      %2079 = vdwg.mxu0
      %2080 = vmatpush.bf16.msra.mxu0 %v1369
      %2081 = vmatpush.bf16.msra.mxu0 %v1361
      %2082 = vmatpush.bf16.msra.mxu0 %v1353
      %2083 = vmatpush.bf16.msra.mxu0 %v1345
      %2084 = vmatpush.bf16.msra.mxu0 %v1337
      %2085 = vmatpush.bf16.msra.mxu0 %v1329
      %2086 = vmatpush.bf16.msra.mxu0 %v1321
      %2087 = vmatpush.bf16.msra.mxu0 %v1313
      %2088 = vmatmul.bf16.gmra.mxu0 %v468
      %v2089 = vpop.f32.mrf.mxu0
      %v2090 = vadd.f32 %v2077, %v2089
      %v2091 = vpop.f32.mrf.mxu0
      %2092 = vdwg.mxu0
      %2093 = vmatpush.bf16.msra.mxu0 %v1433
      %2094 = vmatpush.bf16.msra.mxu0 %v1425
      %2095 = vmatpush.bf16.msra.mxu0 %v1417
      %2096 = vmatpush.bf16.msra.mxu0 %v1409
      %2097 = vmatpush.bf16.msra.mxu0 %v1401
      %2098 = vmatpush.bf16.msra.mxu0 %v1393
      %2099 = vmatpush.bf16.msra.mxu0 %v1385
      %2100 = vmatpush.bf16.msra.mxu0 %v1377
      %2101 = vmatmul.bf16.gmra.mxu0 %v469
      %v2102 = vpop.f32.mrf.mxu0
      %v2103 = vadd.f32 %v2090, %v2102
      %v2104 = vpop.f32.mrf.mxu0
      %2105 = vdwg.mxu0
      %2106 = vmatpush.bf16.msra.mxu0 %v1497
      %2107 = vmatpush.bf16.msra.mxu0 %v1489
      %2108 = vmatpush.bf16.msra.mxu0 %v1481
      %2109 = vmatpush.bf16.msra.mxu0 %v1473
      %2110 = vmatpush.bf16.msra.mxu0 %v1465
      %2111 = vmatpush.bf16.msra.mxu0 %v1457
      %2112 = vmatpush.bf16.msra.mxu0 %v1449
      %2113 = vmatpush.bf16.msra.mxu0 %v1441
      %2114 = vmatmul.bf16.gmra.mxu0 %v470
      %v2115 = vpop.f32.mrf.mxu0
      %v2116 = vadd.f32 %v2103, %v2115
      %v2117 = vpop.f32.mrf.mxu0
      %2118 = vdwg.mxu0
      %2119 = vmatpush.bf16.msra.mxu0 %v1306
      %2120 = vmatpush.bf16.msra.mxu0 %v1298
      %2121 = vmatpush.bf16.msra.mxu0 %v1290
      %2122 = vmatpush.bf16.msra.mxu0 %v1282
      %2123 = vmatpush.bf16.msra.mxu0 %v1274
      %2124 = vmatpush.bf16.msra.mxu0 %v1266
      %2125 = vmatpush.bf16.msra.mxu0 %v1258
      %2126 = vmatpush.bf16.msra.mxu0 %v1250
      %2127 = vmatmul.bf16.gmra.mxu0 %v467
      %v2128 = vpop.f32.mrf.mxu0
      %v2129 = vadd.f32 %v452, %v2128
      %v2130 = vpop.f32.mrf.mxu0
      %2131 = vdwg.mxu0
      %2132 = vmatpush.bf16.msra.mxu0 %v1370
      %2133 = vmatpush.bf16.msra.mxu0 %v1362
      %2134 = vmatpush.bf16.msra.mxu0 %v1354
      %2135 = vmatpush.bf16.msra.mxu0 %v1346
      %2136 = vmatpush.bf16.msra.mxu0 %v1338
      %2137 = vmatpush.bf16.msra.mxu0 %v1330
      %2138 = vmatpush.bf16.msra.mxu0 %v1322
      %2139 = vmatpush.bf16.msra.mxu0 %v1314
      %2140 = vmatmul.bf16.gmra.mxu0 %v468
      %v2141 = vpop.f32.mrf.mxu0
      %v2142 = vadd.f32 %v2129, %v2141
      %v2143 = vpop.f32.mrf.mxu0
      %2144 = vdwg.mxu0
      %2145 = vmatpush.bf16.msra.mxu0 %v1434
      %2146 = vmatpush.bf16.msra.mxu0 %v1426
      %2147 = vmatpush.bf16.msra.mxu0 %v1418
      %2148 = vmatpush.bf16.msra.mxu0 %v1410
      %2149 = vmatpush.bf16.msra.mxu0 %v1402
      %2150 = vmatpush.bf16.msra.mxu0 %v1394
      %2151 = vmatpush.bf16.msra.mxu0 %v1386
      %2152 = vmatpush.bf16.msra.mxu0 %v1378
      %2153 = vmatmul.bf16.gmra.mxu0 %v469
      %v2154 = vpop.f32.mrf.mxu0
      %v2155 = vadd.f32 %v2142, %v2154
      %v2156 = vpop.f32.mrf.mxu0
      %2157 = vdwg.mxu0
      %2158 = vmatpush.bf16.msra.mxu0 %v1498
      %2159 = vmatpush.bf16.msra.mxu0 %v1490
      %2160 = vmatpush.bf16.msra.mxu0 %v1482
      %2161 = vmatpush.bf16.msra.mxu0 %v1474
      %2162 = vmatpush.bf16.msra.mxu0 %v1466
      %2163 = vmatpush.bf16.msra.mxu0 %v1458
      %2164 = vmatpush.bf16.msra.mxu0 %v1450
      %2165 = vmatpush.bf16.msra.mxu0 %v1442
      %2166 = vmatmul.bf16.gmra.mxu0 %v470
      %v2167 = vpop.f32.mrf.mxu0
      %v2168 = vadd.f32 %v2155, %v2167
      %v2169 = vpop.f32.mrf.mxu0
      %2170 = vdwg.mxu0
      %2171 = vmatpush.xpose.msra.mxu0 0.0
      %2172 = vmatpush.xpose.msra.mxu0 0.0
      %2173 = vmatpush.xpose.msra.mxu0 0.0
      %2174 = vmatpush.xpose.msra.mxu0 0.0
      %2175 = vmatpush.xpose.msra.mxu0 0.0
      %2176 = vmatpush.xpose.msra.mxu0 0.0
      %2177 = vmatpush.xpose.msra.mxu0 0.0
      %2178 = vmatpush.xpose.msra.mxu0 0.0
      %2179 = vmatpush.xpose.msra.mxu0 0.0
      %2180 = vmatpush.xpose.msra.mxu0 0.0
      %2181 = vmatpush.xpose.msra.mxu0 0.0
      %2182 = vmatpush.xpose.msra.mxu0 0.0
      %2183 = vmatpush.xpose.msra.mxu0 0.0
      %2184 = vmatpush.xpose.msra.mxu0 0.0
      %2185 = vmatpush.xpose.msra.mxu0 0.0
      %2186 = vmatpush.xpose.msra.mxu0 %v2012
      %2187 = vmatmul.f32.gmra.mxu0 %v1804
      %v2188 = vpop.f32.mrf.mxu0
      %v2189 = vadd.f32 0.0, %v2188
      %2190 = vdwg.mxu0
      %2191 = vmatpush.xpose.msra.mxu0 0.0
      %2192 = vmatpush.xpose.msra.mxu0 0.0
      %2193 = vmatpush.xpose.msra.mxu0 0.0
      %2194 = vmatpush.xpose.msra.mxu0 0.0
      %2195 = vmatpush.xpose.msra.mxu0 0.0
      %2196 = vmatpush.xpose.msra.mxu0 0.0
      %2197 = vmatpush.xpose.msra.mxu0 0.0
      %2198 = vmatpush.xpose.msra.mxu0 0.0
      %2199 = vmatpush.xpose.msra.mxu0 0.0
      %2200 = vmatpush.xpose.msra.mxu0 0.0
      %2201 = vmatpush.xpose.msra.mxu0 0.0
      %2202 = vmatpush.xpose.msra.mxu0 0.0
      %2203 = vmatpush.xpose.msra.mxu0 0.0
      %2204 = vmatpush.xpose.msra.mxu0 0.0
      %2205 = vmatpush.xpose.msra.mxu0 0.0
      %2206 = vmatpush.xpose.msra.mxu0 %v2064
      %2207 = vmatmul.f32.gmra.mxu0 %v1856
      %v2208 = vpop.f32.mrf.mxu0
      %v2209 = vadd.f32 %v2189, %v2208
      %2210 = vdwg.mxu0
      %2211 = vmatpush.xpose.msra.mxu0 0.0
      %2212 = vmatpush.xpose.msra.mxu0 0.0
      %2213 = vmatpush.xpose.msra.mxu0 0.0
      %2214 = vmatpush.xpose.msra.mxu0 0.0
      %2215 = vmatpush.xpose.msra.mxu0 0.0
      %2216 = vmatpush.xpose.msra.mxu0 0.0
      %2217 = vmatpush.xpose.msra.mxu0 0.0
      %2218 = vmatpush.xpose.msra.mxu0 0.0
      %2219 = vmatpush.xpose.msra.mxu0 0.0
      %2220 = vmatpush.xpose.msra.mxu0 0.0
      %2221 = vmatpush.xpose.msra.mxu0 0.0
      %2222 = vmatpush.xpose.msra.mxu0 0.0
      %2223 = vmatpush.xpose.msra.mxu0 0.0
      %2224 = vmatpush.xpose.msra.mxu0 0.0
      %2225 = vmatpush.xpose.msra.mxu0 0.0
      %2226 = vmatpush.xpose.msra.mxu0 %v2116
      %2227 = vmatmul.f32.gmra.mxu0 %v1908
      %v2228 = vpop.f32.mrf.mxu0
      %v2229 = vadd.f32 %v2209, %v2228
      %2230 = vdwg.mxu0
      %2231 = vmatpush.xpose.msra.mxu0 0.0
      %2232 = vmatpush.xpose.msra.mxu0 0.0
      %2233 = vmatpush.xpose.msra.mxu0 0.0
      %2234 = vmatpush.xpose.msra.mxu0 0.0
      %2235 = vmatpush.xpose.msra.mxu0 0.0
      %2236 = vmatpush.xpose.msra.mxu0 0.0
      %2237 = vmatpush.xpose.msra.mxu0 0.0
      %2238 = vmatpush.xpose.msra.mxu0 0.0
      %2239 = vmatpush.xpose.msra.mxu0 0.0
      %2240 = vmatpush.xpose.msra.mxu0 0.0
      %2241 = vmatpush.xpose.msra.mxu0 0.0
      %2242 = vmatpush.xpose.msra.mxu0 0.0
      %2243 = vmatpush.xpose.msra.mxu0 0.0
      %2244 = vmatpush.xpose.msra.mxu0 0.0
      %2245 = vmatpush.xpose.msra.mxu0 0.0
      %2246 = vmatpush.xpose.msra.mxu0 %v2168
      %2247 = vmatmul.f32.gmra.mxu0 %v1960
      %v2248 = vpop.f32.mrf.mxu0
      %v2249 = vadd.f32 %v2229, %v2248
      %2250 = vdwg.mxu0
      %vm2251 = vcmask 27648
      %v2252 = vsel %vm2251, %v2249, 0.0
      %2253 = vadd.xlane.f32.xlu0 %v2252
      %v2254 = vpop.xlane.xlu0 %2253
      %v2255 = vrot.slane %v2254, 4
      %v2256 = vadd.f32 %v2254, %v2255
      %v2257 = vrot.slane %v2256, 2
      %v2258 = vadd.f32 %v2256, %v2257
      %v2259 = vrot.slane %v2258, 1
      %v2260 = vadd.f32 %v2258, %v2259
      %v2261 = vmul.f32 %v2260, 0.0625
      %v2262 = vsub.f32 %v2249, %v2261
      %v2263 = vmul.f32 %v2262, %v2262
      %v2264 = vsel %vm2251, %v2263, 0.0
      %2265 = vadd.xlane.f32.xlu0 %v2264
      %v2266 = vpop.xlane.xlu0 %2265
      %v2267 = vrot.slane %v2266, 4
      %v2268 = vadd.f32 %v2266, %v2267
      %v2269 = vrot.slane %v2268, 2
      %v2270 = vadd.f32 %v2268, %v2269
      %v2271 = vrot.slane %v2270, 1
      %v2272 = vadd.f32 %v2270, %v2271
      %v2273 = vmul.f32 %v2272, 0.06666667
      %v2274 = vrsqrt.pop %v2273
      %v2275 = vmul.f32 %v2274, %v2273
      %v2276 = vmul.f32 %v2275, %v2274
      %v2277 = vmul.f32 0.5, %v2276
      %v2278 = vsub.f32 1.5, %v2277
      %v2279 = vmul.f32 %v2274, %v2278
      %vm2280 = vweird.f32 %v2273
      %vm2281 = vweird.f32 %v2274
      %vm2282 = vmor %vm2280, %vm2281
      %v2283 = vsel %vm2282, %v2274, %v2279
      %v2284 = vmul.f32 %v2262, %v2283
      %v2285 = vmul.f32 %v2284, 1.442695
      %v2286 = vpow.pop %v2285
      %v2287 = vsel %vm2251, %v2286, 0.0
      %2288 = vadd.xlane.f32.xlu0 %v2287
      %v2289 = vpop.xlane.xlu0 %2288
      %v2290 = vrcp.pop %v2289
      %v2291 = vmul.f32 %v2286, %v2290
      %v2292 = vpack.c.bf16 %v2291, %v2291
      %2293 = vst [vmem:[#allocation1] ss:$2 sm:$0xff] %v170
      %s2294 = scalar_lea.vmem [#allocation1], 16
      %2295 = vst [vmem:[%s2294] ss:$2 sm:$0xff] %v171
      %v2296 = vld.sshfl [vmem:[#allocation1] sm:$0xff pattern:$0x75316420]
      %v2297 = vld.sshfl [vmem:[#allocation1 + $0x8] sm:$0xff pattern:$0x75316420]
      %v2298 = vld.sshfl [vmem:[#allocation1 + $0x10] sm:$0xff pattern:$0x75316420]
      %v2299 = vld.sshfl [vmem:[#allocation1 + $0x18] sm:$0xff pattern:$0x75316420]
      %vm2304 = vcmask 31744
      %v2306 = vsel %vm2304, %v2292, 0
      %vm2308 = vcmask 1041408
      %v2310 = vsel %vm2308, %v467, 0
      %v2313 = vsel %vm2308, %v468, 0
      %v2316 = vsel %vm2308, %v469, 0
      %v2319 = vsel %vm2308, %v470, 0
      %2321 = vmatpush.bf16.msra.mxu0 0
      %2322 = vmatpush.bf16.msra.mxu0 0
      %2323 = vmatpush.bf16.msra.mxu0 0
      %2324 = vmatpush.bf16.msra.mxu0 0
      %2325 = vmatpush.bf16.msra.mxu0 0
      %2326 = vmatpush.bf16.msra.mxu0 0
      %2327 = vmatpush.bf16.msra.mxu0 0
      %2328 = vmatpush.bf16.msra.mxu0 %v2310
      %2329 = vmatmul.bf16.gmra.mxu0 %v2306
      %v2330 = vpop.f32.mrf.mxu0
      %v2331 = vadd.f32 %v2296, %v2330
      %v2332 = vpop.f32.mrf.mxu0
      %2333 = vdwg.mxu0
      %2334 = vmatpush.bf16.msra.mxu0 0
      %2335 = vmatpush.bf16.msra.mxu0 0
      %2336 = vmatpush.bf16.msra.mxu0 0
      %2337 = vmatpush.bf16.msra.mxu0 0
      %2338 = vmatpush.bf16.msra.mxu0 0
      %2339 = vmatpush.bf16.msra.mxu0 0
      %2340 = vmatpush.bf16.msra.mxu0 0
      %2341 = vmatpush.bf16.msra.mxu0 %v2313
      %2342 = vmatmul.bf16.gmra.mxu0 %v2306
      %v2343 = vpop.f32.mrf.mxu0
      %v2344 = vadd.f32 %v2297, %v2343
      %v2345 = vpop.f32.mrf.mxu0
      %2346 = vdwg.mxu0
      %2347 = vmatpush.bf16.msra.mxu0 0
      %2348 = vmatpush.bf16.msra.mxu0 0
      %2349 = vmatpush.bf16.msra.mxu0 0
      %2350 = vmatpush.bf16.msra.mxu0 0
      %2351 = vmatpush.bf16.msra.mxu0 0
      %2352 = vmatpush.bf16.msra.mxu0 0
      %2353 = vmatpush.bf16.msra.mxu0 0
      %2354 = vmatpush.bf16.msra.mxu0 %v2316
      %2355 = vmatmul.bf16.gmra.mxu0 %v2306
      %v2356 = vpop.f32.mrf.mxu0
      %v2357 = vadd.f32 %v2298, %v2356
      %v2358 = vpop.f32.mrf.mxu0
      %2359 = vdwg.mxu0
      %2360 = vmatpush.bf16.msra.mxu0 0
      %2361 = vmatpush.bf16.msra.mxu0 0
      %2362 = vmatpush.bf16.msra.mxu0 0
      %2363 = vmatpush.bf16.msra.mxu0 0
      %2364 = vmatpush.bf16.msra.mxu0 0
      %2365 = vmatpush.bf16.msra.mxu0 0
      %2366 = vmatpush.bf16.msra.mxu0 0
      %2367 = vmatpush.bf16.msra.mxu0 %v2319
      %2368 = vmatmul.bf16.gmra.mxu0 %v2306
      %v2369 = vpop.f32.mrf.mxu0
      %v2370 = vadd.f32 %v2299, %v2369
      %v2371 = vpop.f32.mrf.mxu0
      %2372 = vdwg.mxu0
      %vm2373 = vcmask 1043456
      %v2374 = vsel %vm2373, %v2331, 0.0
      %v2375 = vrot.slane %v2374, 4
      %v2376 = vadd.f32 %v2374, %v2375
      %v2377 = vrot.slane %v2376, 2
      %v2378 = vadd.f32 %v2376, %v2377
      %v2379 = vrot.slane %v2378, 1
      %v2380 = vadd.f32 %v2378, %v2379
      %v2381 = vsel %vm2373, %v2344, 0.0
      %v2382 = vrot.slane %v2381, 4
      %v2383 = vadd.f32 %v2381, %v2382
      %v2384 = vrot.slane %v2383, 2
      %v2385 = vadd.f32 %v2383, %v2384
      %v2386 = vrot.slane %v2385, 1
      %v2387 = vadd.f32 %v2385, %v2386
      %v2388 = vsel %vm2373, %v2357, 0.0
      %v2389 = vrot.slane %v2388, 4
      %v2390 = vadd.f32 %v2388, %v2389
      %v2391 = vrot.slane %v2390, 2
      %v2392 = vadd.f32 %v2390, %v2391
      %v2393 = vrot.slane %v2392, 1
      %v2394 = vadd.f32 %v2392, %v2393
      %v2395 = vsel %vm2373, %v2370, 0.0
      %v2396 = vrot.slane %v2395, 4
      %v2397 = vadd.f32 %v2395, %v2396
      %v2398 = vrot.slane %v2397, 2
      %v2399 = vadd.f32 %v2397, %v2398
      %v2400 = vrot.slane %v2399, 1
      %v2401 = vadd.f32 %v2399, %v2400
      %v2402 = vrcp.pop 4.0
      %v2403 = vmul.f32 4.0, %v2402
      %v2404 = vsub.f32 1.0, %v2403
      %v2405 = vmul.f32 %v2402, %v2404
      %v2406 = vadd.f32 %v2402, %v2405
      %vm2407 = vweird.f32 %v2402
      %v2408 = vsel %vm2407, %v2402, %v2406
      %v2409 = vmul.f32 %v2380, %v2408
      %v2410 = vmul.f32 %v2387, %v2408
      %v2411 = vmul.f32 %v2394, %v2408
      %v2412 = vmul.f32 %v2401, %v2408
      %v2417 = vrot.slane %v2410, 7
      %v2418 = vrot.slane %v2411, 6
      %v2419 = vrot.slane %v2412, 5
      %vm2420 = vcmask 1040384
      %v2421 = vsel %vm2420, %v2409, %v2417
      %vm2422 = vcmask 1042434
      %v2423 = vsel %vm2422, %v2418, %v2419
      %v2424 = vsel %vm2308, %v2421, %v2423
      %v2426 = vlaneseq
      %vm2427 = vcmp.ge.s32.totalorder %v2426, 0
      %vm2428 = vcmp.lt.s32.totalorder %v2426, 512
      %vm2429 = vmand %vm2427, %vm2428
      %2430 = vst.msk [vmem:[%s168] sm:$0xf] %vm2429, %v2424
      %p2431 = scmp.lt.s32.totalorder %s14, 1
      %s2432 = scalar_select %p2431, %s14, 1
      %s2433 = smul.addr %s2432, 4
      %s2434 = scalar_lea.vmem %s3, %s2433
      // Predicated region
      $region33: #{conv_graph_sc_forward.1} parent=31 // pred_check
        %p2435 = pneg %p100
      $region34: #{conv_graph_sc_forward.1} parent=31 // pred_check_branch
        %2437 = sbr.rel (%p2435) target = $region36
      $region35: #{conv_graph_sc_forward.1} parent=31 // pred_region
        _
      $region36: #{conv_graph_sc_forward.1} parent=31 // pred_fallthru
        _
    $region32: #{conv_graph_sc_forward.1} parent=5 // pred_fallthru
      _
    %p2438 = scmp.le.s32.totalorder 2, %s9
    // Predicated region
    $region37: #{conv_graph_sc_forward.1} parent=5 // pred_check
      %p2439 = pneg %p2438
    $region38: #{conv_graph_sc_forward.1} parent=5 // pred_check_branch
      %2441 = sbr.rel (%p2439) target = $region40
    $region39: #{conv_graph_sc_forward.1} parent=5 // pred_region
      %s2442 = ssub.s32 %s9, 2
      // Predicated region
      $region41: #{conv_graph_sc_forward.1} parent=39 // pred_check
        %p2443 = pneg %p106
      $region42: #{conv_graph_sc_forward.1} parent=39 // pred_check_branch
        %2445 = sbr.rel (%p2443) target = $region44
      $region43: #{conv_graph_sc_forward.1} parent=39 // pred_region
        %p2446 = scmp.lt.s32.totalorder %s15, 1
        %s2447 = scalar_select %p2446, %s15, 1
        %s2448 = smul.addr %s2447, 4
        %s2449 = scalar_lea.vmem %s3, %s2448
      $region44: #{conv_graph_sc_forward.1} parent=39 // pred_fallthru
        _
    $region40: #{conv_graph_sc_forward.1} parent=5 // pred_fallthru
      _
  $region6: #{conv_graph_sc_forward.1} parent=0 // loop_footer
    %s13 = sadd.s32 1, %s9
  $region7: #{conv_graph_sc_forward.1} parent=0 // loop_footer_branch
    %8 = sbr.rel target = $region3
  $region8: #{conv_graph_sc_forward.1} parent=0 // loop_exit
    _

</llo_original>
